<compile_context>
chip_gen: v7x
topology: tpu7x:2x2x1
jax: 0.10.0
libtpu: 0.0.40
codegen_flags: <defaults>
</compile_context>

<pallas_src>
import functools

import jax
import jax.numpy as jnp
from jax.experimental import pallas as pl
from jax.experimental.pallas import tpu as pltpu


def _srel_vary_eta_kernel(modulus, N_step,
                          phi0_ref, w1_ref, const_ref,
                          w2e_ref, b2e_ref, w2r_ref, b2r_ref,
                          s_ref, eta_ref):
    """Whole SREL recurrence in one invocation; N_step is statically unrolled."""
    phi = phi0_ref[...]                                          # [B, Ls]

    for t in range(N_step):                                      # static unroll
        # Lane-packed s = [modulus*cos(phi) | modulus*sin(phi)]   [B, 2Ls]
        s_cat = modulus * jnp.concatenate([jnp.cos(phi), jnp.sin(phi)], axis=-1)

        # Fused eta|rho first layer. The (w, y) contribution and both biases are
        # pre-folded into const[t]; only the phi-dependent rows are multiplied here.
        pre = (jnp.dot(s_cat, w1_ref[t], preferred_element_type=jnp.float32)
               + const_ref[t])                                   # [B, 2H]
        h = jnp.maximum(pre, 0.0)

        # eta second layer: rho half of h hits zero-padded weight rows -> no slicing.
        eta = (jnp.dot(h, w2e_ref[t], preferred_element_type=jnp.float32)
               + b2e_ref[t])                                     # [B, Ls]

        # rho second layer: VPU multiply + lane reduction (eta half masked by zeros).
        rho = jnp.sum(h * w2r_ref[t], axis=-1, keepdims=True) + b2r_ref[t]   # [B, 1]

        # Record this step's s (pre-update phi) and eta with lane-dense stores.
        s_ref[t] = s_cat
        eta_ref[t] = eta

        phi = phi - rho * eta

    # Final s from the post-update phi (done in-kernel; EUP has slack).
    s_ref[N_step] = modulus * jnp.concatenate([jnp.cos(phi), jnp.sin(phi)], axis=-1)


@functools.partial(jax.jit, static_argnames=("modulus", "N_step"))
def srel_vary_eta_forward(phi_batch, w_batch, y, params, *, modulus, N_step):
    """Pallas implementation of SREL_vary_eta.forward.

    phi_batch: [B, Ls] float32
    w_batch:   [B, Lw] complex64
    y:         [Ly]    float32
    params:    per-step MLP weights, leading axis N_step (see _init_params).
    """
    B, Ls = phi_batch.shape
    Ly = y.shape[0]
    H = params["eta_W2"].shape[1]

    phi0 = phi_batch.astype(jnp.float32)
    wr = jnp.real(w_batch).astype(jnp.float32)
    wi = jnp.imag(w_batch).astype(jnp.float32)
    y_rep = jnp.broadcast_to(y.astype(jnp.float32)[None, :], (B, Ly))
    wy = jnp.concatenate([wr, wi, y_rep], axis=1)                # [B, 2Lw+Ly]

    # Fuse eta / rho first-layer weights along the output dim -> width 2H.
    W1 = jnp.concatenate([params["eta_W1"], params["rho_W1"]], axis=-1)   # [T, in_dim, 2H]
    b1 = jnp.concatenate([params["eta_b1"], params["rho_b1"]], axis=-1)   # [T, 1, 2H]
    w1s = W1[:, :2 * Ls, :]                                      # [s.re|s.im] rows [T, 2Ls, 2H]
    # Hoist the step-invariant (w, y) contribution of both first layers.
    const = jnp.einsum("bk,tkh->tbh", wy, W1[:, 2 * Ls:, :]) + b1          # [T, B, 2H]

    # Second layers, zero-padded so the kernel never slices h along the lane axis.
    w2e = jnp.concatenate([params["eta_W2"], jnp.zeros_like(params["eta_W2"])],
                          axis=1)                                          # [T, 2H, Ls]
    w2r = jnp.concatenate([jnp.zeros((N_step, 1, H), jnp.float32),
                           jnp.transpose(params["rho_W2"], (0, 2, 1))],
                          axis=-1)                                         # [T, 1, 2H]
    b2e = params["eta_b2"].astype(jnp.float32)                             # [T, 1, Ls]
    b2r = params["rho_b2"].reshape(N_step).astype(jnp.float32)             # [T] -> SMEM

    kernel = functools.partial(_srel_vary_eta_kernel, float(modulus), N_step)
    vmem = pl.BlockSpec(memory_space=pltpu.MemorySpace.VMEM)
    smem = pl.BlockSpec(memory_space=pltpu.MemorySpace.SMEM)

    s_pack, eta_s = pl.pallas_call(
        kernel,
        out_shape=(
            jax.ShapeDtypeStruct((N_step + 1, B, 2 * Ls), jnp.float32),  # [s.re|s.im], step-major
            jax.ShapeDtypeStruct((N_step, B, Ls), jnp.float32),          # eta,         step-major
        ),
        in_specs=[vmem, vmem, vmem, vmem, vmem, vmem, smem],
        out_specs=(vmem, vmem),
    )(phi0, w1s, const, w2e, b2e, w2r, b2r)

    # Complex64 assembly must happen outside the kernel; the slice + transpose to
    # the PyTorch layout fuses with it under jit.
    s_cplx = jax.lax.complex(s_pack[..., :Ls], s_pack[..., Ls:])          # [T+1, B, Ls]
    s_stack_batch = jnp.transpose(s_cplx, (1, 0, 2))                      # [B, T+1, Ls]
    eta_stack_batch = jnp.transpose(eta_s, (1, 0, 2))                     # [B, T, Ls]
    return {"s_stack_batch": s_stack_batch, "eta_stack_batch": eta_stack_batch}


def _init_params(key, in_dim, hidden, Ls, N_step):
    ks = jax.random.split(key, 8)
    scale = 0.05
    return {
        # per-step Estimate_eta (vary_eta: ModuleList of N_step modules)
        "eta_W1": scale * jax.random.normal(ks[0], (N_step, in_dim, hidden), jnp.float32),
        "eta_b1": scale * jax.random.normal(ks[1], (N_step, 1, hidden), jnp.float32),
        "eta_W2": scale * jax.random.normal(ks[2], (N_step, hidden, Ls), jnp.float32),
        "eta_b2": scale * jax.random.normal(ks[3], (N_step, 1, Ls), jnp.float32),
        # per-step est_rho (ModuleList branch of model_intra_phase1)
        "rho_W1": scale * jax.random.normal(ks[4], (N_step, in_dim, hidden), jnp.float32),
        "rho_b1": scale * jax.random.normal(ks[5], (N_step, 1, hidden), jnp.float32),
        "rho_W2": scale * jax.random.normal(ks[6], (N_step, hidden, 1), jnp.float32),
        "rho_b2": scale * jax.random.normal(ks[7], (N_step, 1, 1), jnp.float32),
    }


def _reference_forward(phi, w, y, params, modulus, N_step):
    """Pure-JAX reference mirroring the PyTorch loop (same assumed MLPs)."""
    B = phi.shape[0]
    y_rep = jnp.broadcast_to(y[None, :], (B, y.shape[0]))
    s_steps, eta_steps = [], []
    for t in range(N_step):
        s = modulus * jnp.exp(1j * phi)
        x = jnp.concatenate([jnp.real(s), jnp.imag(s),
                             jnp.real(w), jnp.imag(w), y_rep], axis=1)
        h_e = jnp.maximum(x @ params["eta_W1"][t] + params["eta_b1"][t], 0.0)
        eta = h_e @ params["eta_W2"][t] + params["eta_b2"][t]
        h_r = jnp.maximum(x @ params["rho_W1"][t] + params["rho_b1"][t], 0.0)
        rho = h_r @ params["rho_W2"][t] + params["rho_b2"][t]
        s_steps.append(s)
        eta_steps.append(eta)
        phi = phi - rho * eta
    s_steps.append(modulus * jnp.exp(1j * phi))
    return (jnp.stack(s_steps, axis=1).astype(jnp.complex64),
            jnp.stack(eta_steps, axis=1))


if __name__ == "__main__":
    # constants: M (unused in forward), Ls = Nt*N, Lw, Ly, N_step, modulus
    B = 4
    Nt, N = 4, 8
    Ls = Nt * N           # 32
    Lw = 16
    Ly = 24
    N_step = 4
    modulus = 1.0
    hidden = 32
    in_dim = 2 * Ls + 2 * Lw + Ly   # 120

    key = jax.random.PRNGKey(0)
    k_phi, k_wr, k_wi, k_y, k_par = jax.random.split(key, 5)

    phi_batch = jax.random.uniform(k_phi, (B, Ls), jnp.float32,
                                   minval=-3.14, maxval=3.14)
    w_batch = (jax.random.normal(k_wr, (B, Lw), jnp.float32)
               + 1j * jax.random.normal(k_wi, (B, Lw), jnp.float32)
               ).astype(jnp.complex64)
    y = jax.random.normal(k_y, (Ly,), jnp.float32)

    params = _init_params(k_par, in_dim, hidden, Ls, N_step)

    outputs = srel_vary_eta_forward(phi_batch, w_batch, y, params,
                                    modulus=modulus, N_step=N_step)
    jax.block_until_ready(outputs)

    assert outputs["s_stack_batch"].shape == (B, N_step + 1, Ls)
    assert outputs["s_stack_batch"].dtype == jnp.complex64
    assert outputs["eta_stack_batch"].shape == (B, N_step, Ls)
    assert outputs["eta_stack_batch"].dtype == jnp.float32

    # Numerical check against the pure-JAX reference (generous tolerance to
    # absorb TPU matmul-precision differences; real bugs are orders larger).
    s_ref, eta_ref = _reference_forward(phi_batch, w_batch, y, params,
                                        float(modulus), N_step)
    assert jnp.allclose(outputs["s_stack_batch"], s_ref, rtol=2e-2, atol=2e-2), \
        float(jnp.max(jnp.abs(outputs["s_stack_batch"] - s_ref)))
    assert jnp.allclose(outputs["eta_stack_batch"], eta_ref, rtol=2e-2, atol=2e-2), \
        float(jnp.max(jnp.abs(outputs["eta_stack_batch"] - eta_ref)))

    print("KERNEL_OK")
</pallas_src>

<mosaic_0001>
module attributes {stable_mosaic.version = 11 : i64} {
  func.func @_srel_vary_eta_kernel(%arg0: memref<4x32xf32, #tpu.memory_space<vmem>>, %arg1: memref<4x64x64xf32, #tpu.memory_space<vmem>>, %arg2: memref<4x4x64xf32, #tpu.memory_space<vmem>>, %arg3: memref<4x64x32xf32, #tpu.memory_space<vmem>>, %arg4: memref<4x1x32xf32, #tpu.memory_space<vmem>>, %arg5: memref<4x1x64xf32, #tpu.memory_space<vmem>>, %arg6: memref<4xf32, #tpu.memory_space<smem>>, %arg7: memref<5x4x64xf32, #tpu.memory_space<vmem>>, %arg8: memref<4x4x32xf32, #tpu.memory_space<vmem>>) attributes {dimension_semantics = [], scalar_prefetch = 0 : i64, scratch_operands = 0 : i64, tpu.core_type = #tpu.core_type<tc>} {
    %c0 = arith.constant 0 : index
    %c0_0 = arith.constant 0 : index
    %0 = vector.load %arg0[%c0, %c0_0] : memref<4x32xf32, #tpu.memory_space<vmem>>, vector<4x32xf32>
    %1 = math.cos %0 : vector<4x32xf32>
    %2 = math.sin %0 : vector<4x32xf32>
    %3 = tpu.concatenate %1, %2 in 1 : vector<4x32xf32>, vector<4x32xf32> -> vector<4x64xf32>
    %cst = arith.constant 1.000000e+00 : f32
    %4 = vector.broadcast %cst : f32 to vector<4x64xf32>
    %5 = arith.mulf %4, %3 : vector<4x64xf32>
    %c0_1 = arith.constant 0 : index
    %c0_2 = arith.constant 0 : index
    %c0_3 = arith.constant 0 : index
    %6 = vector.load %arg1[%c0_1, %c0_2, %c0_3] : memref<4x64x64xf32, #tpu.memory_space<vmem>>, vector<1x64x64xf32>
    %7 = vector.shape_cast %6 : vector<1x64x64xf32> to vector<64x64xf32>
    %cst_4 = arith.constant dense<0.000000e+00> : vector<4x64xf32>
    %8 = tpu.matmul %5, %7, %cst_4 {dimension_numbers = #tpu.dot_dimension_numbers<[1], [0], [0], [1], [0, 0, 1, 1], [], []>} : vector<4x64xf32>, vector<64x64xf32>, vector<4x64xf32> -> vector<4x64xf32>
    %c0_5 = arith.constant 0 : index
    %c0_6 = arith.constant 0 : index
    %c0_7 = arith.constant 0 : index
    %9 = vector.load %arg2[%c0_5, %c0_6, %c0_7] : memref<4x4x64xf32, #tpu.memory_space<vmem>>, vector<1x4x64xf32>
    %10 = vector.shape_cast %9 : vector<1x4x64xf32> to vector<4x64xf32>
    %11 = arith.addf %8, %10 : vector<4x64xf32>
    %cst_8 = arith.constant 0.000000e+00 : f32
    %12 = vector.broadcast %cst_8 : f32 to vector<4x64xf32>
    %13 = arith.maximumf %11, %12 : vector<4x64xf32>
    %c0_9 = arith.constant 0 : index
    %c0_10 = arith.constant 0 : index
    %c0_11 = arith.constant 0 : index
    %14 = vector.load %arg3[%c0_9, %c0_10, %c0_11] : memref<4x64x32xf32, #tpu.memory_space<vmem>>, vector<1x64x32xf32>
    %15 = vector.shape_cast %14 : vector<1x64x32xf32> to vector<64x32xf32>
    %cst_12 = arith.constant dense<0.000000e+00> : vector<4x32xf32>
    %16 = tpu.matmul %13, %15, %cst_12 {dimension_numbers = #tpu.dot_dimension_numbers<[1], [0], [0], [1], [0, 0, 1, 1], [], []>} : vector<4x64xf32>, vector<64x32xf32>, vector<4x32xf32> -> vector<4x32xf32>
    %c0_13 = arith.constant 0 : index
    %c0_14 = arith.constant 0 : index
    %c0_15 = arith.constant 0 : index
    %17 = vector.load %arg4[%c0_13, %c0_14, %c0_15] : memref<4x1x32xf32, #tpu.memory_space<vmem>>, vector<1x1x32xf32>
    %18 = vector.shape_cast %17 : vector<1x1x32xf32> to vector<1x32xf32>
    %19 = vector.broadcast %18 : vector<1x32xf32> to vector<4x32xf32>
    %20 = arith.addf %16, %19 : vector<4x32xf32>
    %c0_16 = arith.constant 0 : index
    %c0_17 = arith.constant 0 : index
    %c0_18 = arith.constant 0 : index
    %21 = vector.load %arg5[%c0_16, %c0_17, %c0_18] : memref<4x1x64xf32, #tpu.memory_space<vmem>>, vector<1x1x64xf32>
    %22 = vector.shape_cast %21 : vector<1x1x64xf32> to vector<1x64xf32>
    %23 = vector.broadcast %22 : vector<1x64xf32> to vector<4x64xf32>
    %24 = arith.mulf %13, %23 : vector<4x64xf32>
    %cst_19 = arith.constant dense<0.000000e+00> : vector<4xf32>
    %25 = vector.multi_reduction <add>, %24, %cst_19 [1] : vector<4x64xf32> to vector<4xf32>
    %26 = vector.shape_cast %25 : vector<4xf32> to vector<4x1xf32>
    %c0_20 = arith.constant 0 : index
    %27 = memref.load %arg6[%c0_20] : memref<4xf32, #tpu.memory_space<smem>>
    %28 = vector.broadcast %27 : f32 to vector<4x1xf32>
    %29 = arith.addf %26, %28 : vector<4x1xf32>
    %c0_21 = arith.constant 0 : index
    %c0_22 = arith.constant 0 : index
    %c0_23 = arith.constant 0 : index
    %30 = vector.load %arg7[%c0_21, %c0_22, %c0_23] : memref<5x4x64xf32, #tpu.memory_space<vmem>>, vector<1x4x64xf32>
    %31 = vector.shape_cast %30 : vector<1x4x64xf32> to vector<4x64xf32>
    %32 = vector.shape_cast %5 : vector<4x64xf32> to vector<1x4x64xf32>
    tpu.vector_store %arg7[%c0_21, %c0_22, %c0_23], %32 {strides = array<i32>} : memref<5x4x64xf32, #tpu.memory_space<vmem>>, vector<1x4x64xf32>,
    %c0_24 = arith.constant 0 : index
    %c0_25 = arith.constant 0 : index
    %c0_26 = arith.constant 0 : index
    %33 = vector.load %arg8[%c0_24, %c0_25, %c0_26] : memref<4x4x32xf32, #tpu.memory_space<vmem>>, vector<1x4x32xf32>
    %34 = vector.shape_cast %33 : vector<1x4x32xf32> to vector<4x32xf32>
    %35 = vector.shape_cast %20 : vector<4x32xf32> to vector<1x4x32xf32>
    tpu.vector_store %arg8[%c0_24, %c0_25, %c0_26], %35 {strides = array<i32>} : memref<4x4x32xf32, #tpu.memory_space<vmem>>, vector<1x4x32xf32>,
    %36 = vector.broadcast %29 : vector<4x1xf32> to vector<4x32xf32>
    %37 = arith.mulf %36, %20 : vector<4x32xf32>
    %38 = arith.subf %0, %37 : vector<4x32xf32>
    %39 = math.cos %38 : vector<4x32xf32>
    %40 = math.sin %38 : vector<4x32xf32>
    %41 = tpu.concatenate %39, %40 in 1 : vector<4x32xf32>, vector<4x32xf32> -> vector<4x64xf32>
    %cst_27 = arith.constant 1.000000e+00 : f32
    %42 = vector.broadcast %cst_27 : f32 to vector<4x64xf32>
    %43 = arith.mulf %42, %41 : vector<4x64xf32>
    %c1 = arith.constant 1 : index
    %c0_28 = arith.constant 0 : index
    %c0_29 = arith.constant 0 : index
    %44 = vector.load %arg1[%c1, %c0_28, %c0_29] : memref<4x64x64xf32, #tpu.memory_space<vmem>>, vector<1x64x64xf32>
    %45 = vector.shape_cast %44 : vector<1x64x64xf32> to vector<64x64xf32>
    %cst_30 = arith.constant dense<0.000000e+00> : vector<4x64xf32>
    %46 = tpu.matmul %43, %45, %cst_30 {dimension_numbers = #tpu.dot_dimension_numbers<[1], [0], [0], [1], [0, 0, 1, 1], [], []>} : vector<4x64xf32>, vector<64x64xf32>, vector<4x64xf32> -> vector<4x64xf32>
    %c1_31 = arith.constant 1 : index
    %c0_32 = arith.constant 0 : index
    %c0_33 = arith.constant 0 : index
    %47 = vector.load %arg2[%c1_31, %c0_32, %c0_33] : memref<4x4x64xf32, #tpu.memory_space<vmem>>, vector<1x4x64xf32>
    %48 = vector.shape_cast %47 : vector<1x4x64xf32> to vector<4x64xf32>
    %49 = arith.addf %46, %48 : vector<4x64xf32>
    %cst_34 = arith.constant 0.000000e+00 : f32
    %50 = vector.broadcast %cst_34 : f32 to vector<4x64xf32>
    %51 = arith.maximumf %49, %50 : vector<4x64xf32>
    %c1_35 = arith.constant 1 : index
    %c0_36 = arith.constant 0 : index
    %c0_37 = arith.constant 0 : index
    %52 = vector.load %arg3[%c1_35, %c0_36, %c0_37] : memref<4x64x32xf32, #tpu.memory_space<vmem>>, vector<1x64x32xf32>
    %53 = vector.shape_cast %52 : vector<1x64x32xf32> to vector<64x32xf32>
    %cst_38 = arith.constant dense<0.000000e+00> : vector<4x32xf32>
    %54 = tpu.matmul %51, %53, %cst_38 {dimension_numbers = #tpu.dot_dimension_numbers<[1], [0], [0], [1], [0, 0, 1, 1], [], []>} : vector<4x64xf32>, vector<64x32xf32>, vector<4x32xf32> -> vector<4x32xf32>
    %c1_39 = arith.constant 1 : index
    %c0_40 = arith.constant 0 : index
    %c0_41 = arith.constant 0 : index
    %55 = vector.load %arg4[%c1_39, %c0_40, %c0_41] : memref<4x1x32xf32, #tpu.memory_space<vmem>>, vector<1x1x32xf32>
    %56 = vector.shape_cast %55 : vector<1x1x32xf32> to vector<1x32xf32>
    %57 = vector.broadcast %56 : vector<1x32xf32> to vector<4x32xf32>
    %58 = arith.addf %54, %57 : vector<4x32xf32>
    %c1_42 = arith.constant 1 : index
    %c0_43 = arith.constant 0 : index
    %c0_44 = arith.constant 0 : index
    %59 = vector.load %arg5[%c1_42, %c0_43, %c0_44] : memref<4x1x64xf32, #tpu.memory_space<vmem>>, vector<1x1x64xf32>
    %60 = vector.shape_cast %59 : vector<1x1x64xf32> to vector<1x64xf32>
    %61 = vector.broadcast %60 : vector<1x64xf32> to vector<4x64xf32>
    %62 = arith.mulf %51, %61 : vector<4x64xf32>
    %cst_45 = arith.constant dense<0.000000e+00> : vector<4xf32>
    %63 = vector.multi_reduction <add>, %62, %cst_45 [1] : vector<4x64xf32> to vector<4xf32>
    %64 = vector.shape_cast %63 : vector<4xf32> to vector<4x1xf32>
    %c1_46 = arith.constant 1 : index
    %65 = memref.load %arg6[%c1_46] : memref<4xf32, #tpu.memory_space<smem>>
    %66 = vector.broadcast %65 : f32 to vector<4x1xf32>
    %67 = arith.addf %64, %66 : vector<4x1xf32>
    %c1_47 = arith.constant 1 : index
    %c0_48 = arith.constant 0 : index
    %c0_49 = arith.constant 0 : index
    %68 = vector.load %arg7[%c1_47, %c0_48, %c0_49] : memref<5x4x64xf32, #tpu.memory_space<vmem>>, vector<1x4x64xf32>
    %69 = vector.shape_cast %68 : vector<1x4x64xf32> to vector<4x64xf32>
    %70 = vector.shape_cast %43 : vector<4x64xf32> to vector<1x4x64xf32>
    tpu.vector_store %arg7[%c1_47, %c0_48, %c0_49], %70 {strides = array<i32>} : memref<5x4x64xf32, #tpu.memory_space<vmem>>, vector<1x4x64xf32>,
    %c1_50 = arith.constant 1 : index
    %c0_51 = arith.constant 0 : index
    %c0_52 = arith.constant 0 : index
    %71 = vector.load %arg8[%c1_50, %c0_51, %c0_52] : memref<4x4x32xf32, #tpu.memory_space<vmem>>, vector<1x4x32xf32>
    %72 = vector.shape_cast %71 : vector<1x4x32xf32> to vector<4x32xf32>
    %73 = vector.shape_cast %58 : vector<4x32xf32> to vector<1x4x32xf32>
    tpu.vector_store %arg8[%c1_50, %c0_51, %c0_52], %73 {strides = array<i32>} : memref<4x4x32xf32, #tpu.memory_space<vmem>>, vector<1x4x32xf32>,
    %74 = vector.broadcast %67 : vector<4x1xf32> to vector<4x32xf32>
    %75 = arith.mulf %74, %58 : vector<4x32xf32>
    %76 = arith.subf %38, %75 : vector<4x32xf32>
    %77 = math.cos %76 : vector<4x32xf32>
    %78 = math.sin %76 : vector<4x32xf32>
    %79 = tpu.concatenate %77, %78 in 1 : vector<4x32xf32>, vector<4x32xf32> -> vector<4x64xf32>
    %cst_53 = arith.constant 1.000000e+00 : f32
    %80 = vector.broadcast %cst_53 : f32 to vector<4x64xf32>
    %81 = arith.mulf %80, %79 : vector<4x64xf32>
    %c2 = arith.constant 2 : index
    %c0_54 = arith.constant 0 : index
    %c0_55 = arith.constant 0 : index
    %82 = vector.load %arg1[%c2, %c0_54, %c0_55] : memref<4x64x64xf32, #tpu.memory_space<vmem>>, vector<1x64x64xf32>
    %83 = vector.shape_cast %82 : vector<1x64x64xf32> to vector<64x64xf32>
    %cst_56 = arith.constant dense<0.000000e+00> : vector<4x64xf32>
    %84 = tpu.matmul %81, %83, %cst_56 {dimension_numbers = #tpu.dot_dimension_numbers<[1], [0], [0], [1], [0, 0, 1, 1], [], []>} : vector<4x64xf32>, vector<64x64xf32>, vector<4x64xf32> -> vector<4x64xf32>
    %c2_57 = arith.constant 2 : index
    %c0_58 = arith.constant 0 : index
    %c0_59 = arith.constant 0 : index
    %85 = vector.load %arg2[%c2_57, %c0_58, %c0_59] : memref<4x4x64xf32, #tpu.memory_space<vmem>>, vector<1x4x64xf32>
    %86 = vector.shape_cast %85 : vector<1x4x64xf32> to vector<4x64xf32>
    %87 = arith.addf %84, %86 : vector<4x64xf32>
    %cst_60 = arith.constant 0.000000e+00 : f32
    %88 = vector.broadcast %cst_60 : f32 to vector<4x64xf32>
    %89 = arith.maximumf %87, %88 : vector<4x64xf32>
    %c2_61 = arith.constant 2 : index
    %c0_62 = arith.constant 0 : index
    %c0_63 = arith.constant 0 : index
    %90 = vector.load %arg3[%c2_61, %c0_62, %c0_63] : memref<4x64x32xf32, #tpu.memory_space<vmem>>, vector<1x64x32xf32>
    %91 = vector.shape_cast %90 : vector<1x64x32xf32> to vector<64x32xf32>
    %cst_64 = arith.constant dense<0.000000e+00> : vector<4x32xf32>
    %92 = tpu.matmul %89, %91, %cst_64 {dimension_numbers = #tpu.dot_dimension_numbers<[1], [0], [0], [1], [0, 0, 1, 1], [], []>} : vector<4x64xf32>, vector<64x32xf32>, vector<4x32xf32> -> vector<4x32xf32>
    %c2_65 = arith.constant 2 : index
    %c0_66 = arith.constant 0 : index
    %c0_67 = arith.constant 0 : index
    %93 = vector.load %arg4[%c2_65, %c0_66, %c0_67] : memref<4x1x32xf32, #tpu.memory_space<vmem>>, vector<1x1x32xf32>
    %94 = vector.shape_cast %93 : vector<1x1x32xf32> to vector<1x32xf32>
    %95 = vector.broadcast %94 : vector<1x32xf32> to vector<4x32xf32>
    %96 = arith.addf %92, %95 : vector<4x32xf32>
    %c2_68 = arith.constant 2 : index
    %c0_69 = arith.constant 0 : index
    %c0_70 = arith.constant 0 : index
    %97 = vector.load %arg5[%c2_68, %c0_69, %c0_70] : memref<4x1x64xf32, #tpu.memory_space<vmem>>, vector<1x1x64xf32>
    %98 = vector.shape_cast %97 : vector<1x1x64xf32> to vector<1x64xf32>
    %99 = vector.broadcast %98 : vector<1x64xf32> to vector<4x64xf32>
    %100 = arith.mulf %89, %99 : vector<4x64xf32>
    %cst_71 = arith.constant dense<0.000000e+00> : vector<4xf32>
    %101 = vector.multi_reduction <add>, %100, %cst_71 [1] : vector<4x64xf32> to vector<4xf32>
    %102 = vector.shape_cast %101 : vector<4xf32> to vector<4x1xf32>
    %c2_72 = arith.constant 2 : index
    %103 = memref.load %arg6[%c2_72] : memref<4xf32, #tpu.memory_space<smem>>
    %104 = vector.broadcast %103 : f32 to vector<4x1xf32>
    %105 = arith.addf %102, %104 : vector<4x1xf32>
    %c2_73 = arith.constant 2 : index
    %c0_74 = arith.constant 0 : index
    %c0_75 = arith.constant 0 : index
    %106 = vector.load %arg7[%c2_73, %c0_74, %c0_75] : memref<5x4x64xf32, #tpu.memory_space<vmem>>, vector<1x4x64xf32>
    %107 = vector.shape_cast %106 : vector<1x4x64xf32> to vector<4x64xf32>
    %108 = vector.shape_cast %81 : vector<4x64xf32> to vector<1x4x64xf32>
    tpu.vector_store %arg7[%c2_73, %c0_74, %c0_75], %108 {strides = array<i32>} : memref<5x4x64xf32, #tpu.memory_space<vmem>>, vector<1x4x64xf32>,
    %c2_76 = arith.constant 2 : index
    %c0_77 = arith.constant 0 : index
    %c0_78 = arith.constant 0 : index
    %109 = vector.load %arg8[%c2_76, %c0_77, %c0_78] : memref<4x4x32xf32, #tpu.memory_space<vmem>>, vector<1x4x32xf32>
    %110 = vector.shape_cast %109 : vector<1x4x32xf32> to vector<4x32xf32>
    %111 = vector.shape_cast %96 : vector<4x32xf32> to vector<1x4x32xf32>
    tpu.vector_store %arg8[%c2_76, %c0_77, %c0_78], %111 {strides = array<i32>} : memref<4x4x32xf32, #tpu.memory_space<vmem>>, vector<1x4x32xf32>,
    %112 = vector.broadcast %105 : vector<4x1xf32> to vector<4x32xf32>
    %113 = arith.mulf %112, %96 : vector<4x32xf32>
    %114 = arith.subf %76, %113 : vector<4x32xf32>
    %115 = math.cos %114 : vector<4x32xf32>
    %116 = math.sin %114 : vector<4x32xf32>
    %117 = tpu.concatenate %115, %116 in 1 : vector<4x32xf32>, vector<4x32xf32> -> vector<4x64xf32>
    %cst_79 = arith.constant 1.000000e+00 : f32
    %118 = vector.broadcast %cst_79 : f32 to vector<4x64xf32>
    %119 = arith.mulf %118, %117 : vector<4x64xf32>
    %c3 = arith.constant 3 : index
    %c0_80 = arith.constant 0 : index
    %c0_81 = arith.constant 0 : index
    %120 = vector.load %arg1[%c3, %c0_80, %c0_81] : memref<4x64x64xf32, #tpu.memory_space<vmem>>, vector<1x64x64xf32>
    %121 = vector.shape_cast %120 : vector<1x64x64xf32> to vector<64x64xf32>
    %cst_82 = arith.constant dense<0.000000e+00> : vector<4x64xf32>
    %122 = tpu.matmul %119, %121, %cst_82 {dimension_numbers = #tpu.dot_dimension_numbers<[1], [0], [0], [1], [0, 0, 1, 1], [], []>} : vector<4x64xf32>, vector<64x64xf32>, vector<4x64xf32> -> vector<4x64xf32>
    %c3_83 = arith.constant 3 : index
    %c0_84 = arith.constant 0 : index
    %c0_85 = arith.constant 0 : index
    %123 = vector.load %arg2[%c3_83, %c0_84, %c0_85] : memref<4x4x64xf32, #tpu.memory_space<vmem>>, vector<1x4x64xf32>
    %124 = vector.shape_cast %123 : vector<1x4x64xf32> to vector<4x64xf32>
    %125 = arith.addf %122, %124 : vector<4x64xf32>
    %cst_86 = arith.constant 0.000000e+00 : f32
    %126 = vector.broadcast %cst_86 : f32 to vector<4x64xf32>
    %127 = arith.maximumf %125, %126 : vector<4x64xf32>
    %c3_87 = arith.constant 3 : index
    %c0_88 = arith.constant 0 : index
    %c0_89 = arith.constant 0 : index
    %128 = vector.load %arg3[%c3_87, %c0_88, %c0_89] : memref<4x64x32xf32, #tpu.memory_space<vmem>>, vector<1x64x32xf32>
    %129 = vector.shape_cast %128 : vector<1x64x32xf32> to vector<64x32xf32>
    %cst_90 = arith.constant dense<0.000000e+00> : vector<4x32xf32>
    %130 = tpu.matmul %127, %129, %cst_90 {dimension_numbers = #tpu.dot_dimension_numbers<[1], [0], [0], [1], [0, 0, 1, 1], [], []>} : vector<4x64xf32>, vector<64x32xf32>, vector<4x32xf32> -> vector<4x32xf32>
    %c3_91 = arith.constant 3 : index
    %c0_92 = arith.constant 0 : index
    %c0_93 = arith.constant 0 : index
    %131 = vector.load %arg4[%c3_91, %c0_92, %c0_93] : memref<4x1x32xf32, #tpu.memory_space<vmem>>, vector<1x1x32xf32>
    %132 = vector.shape_cast %131 : vector<1x1x32xf32> to vector<1x32xf32>
    %133 = vector.broadcast %132 : vector<1x32xf32> to vector<4x32xf32>
    %134 = arith.addf %130, %133 : vector<4x32xf32>
    %c3_94 = arith.constant 3 : index
    %c0_95 = arith.constant 0 : index
    %c0_96 = arith.constant 0 : index
    %135 = vector.load %arg5[%c3_94, %c0_95, %c0_96] : memref<4x1x64xf32, #tpu.memory_space<vmem>>, vector<1x1x64xf32>
    %136 = vector.shape_cast %135 : vector<1x1x64xf32> to vector<1x64xf32>
    %137 = vector.broadcast %136 : vector<1x64xf32> to vector<4x64xf32>
    %138 = arith.mulf %127, %137 : vector<4x64xf32>
    %cst_97 = arith.constant dense<0.000000e+00> : vector<4xf32>
    %139 = vector.multi_reduction <add>, %138, %cst_97 [1] : vector<4x64xf32> to vector<4xf32>
    %140 = vector.shape_cast %139 : vector<4xf32> to vector<4x1xf32>
    %c3_98 = arith.constant 3 : index
    %141 = memref.load %arg6[%c3_98] : memref<4xf32, #tpu.memory_space<smem>>
    %142 = vector.broadcast %141 : f32 to vector<4x1xf32>
    %143 = arith.addf %140, %142 : vector<4x1xf32>
    %c3_99 = arith.constant 3 : index
    %c0_100 = arith.constant 0 : index
    %c0_101 = arith.constant 0 : index
    %144 = vector.load %arg7[%c3_99, %c0_100, %c0_101] : memref<5x4x64xf32, #tpu.memory_space<vmem>>, vector<1x4x64xf32>
    %145 = vector.shape_cast %144 : vector<1x4x64xf32> to vector<4x64xf32>
    %146 = vector.shape_cast %119 : vector<4x64xf32> to vector<1x4x64xf32>
    tpu.vector_store %arg7[%c3_99, %c0_100, %c0_101], %146 {strides = array<i32>} : memref<5x4x64xf32, #tpu.memory_space<vmem>>, vector<1x4x64xf32>,
    %c3_102 = arith.constant 3 : index
    %c0_103 = arith.constant 0 : index
    %c0_104 = arith.constant 0 : index
    %147 = vector.load %arg8[%c3_102, %c0_103, %c0_104] : memref<4x4x32xf32, #tpu.memory_space<vmem>>, vector<1x4x32xf32>
    %148 = vector.shape_cast %147 : vector<1x4x32xf32> to vector<4x32xf32>
    %149 = vector.shape_cast %134 : vector<4x32xf32> to vector<1x4x32xf32>
    tpu.vector_store %arg8[%c3_102, %c0_103, %c0_104], %149 {strides = array<i32>} : memref<4x4x32xf32, #tpu.memory_space<vmem>>, vector<1x4x32xf32>,
    %150 = vector.broadcast %143 : vector<4x1xf32> to vector<4x32xf32>
    %151 = arith.mulf %150, %134 : vector<4x32xf32>
    %152 = arith.subf %114, %151 : vector<4x32xf32>
    %153 = math.cos %152 : vector<4x32xf32>
    %154 = math.sin %152 : vector<4x32xf32>
    %155 = tpu.concatenate %153, %154 in 1 : vector<4x32xf32>, vector<4x32xf32> -> vector<4x64xf32>
    %cst_105 = arith.constant 1.000000e+00 : f32
    %156 = vector.broadcast %cst_105 : f32 to vector<4x64xf32>
    %157 = arith.mulf %156, %155 : vector<4x64xf32>
    %c4 = arith.constant 4 : index
    %c0_106 = arith.constant 0 : index
    %c0_107 = arith.constant 0 : index
    %158 = vector.load %arg7[%c4, %c0_106, %c0_107] : memref<5x4x64xf32, #tpu.memory_space<vmem>>, vector<1x4x64xf32>
    %159 = vector.shape_cast %158 : vector<1x4x64xf32> to vector<4x64xf32>
    %160 = vector.shape_cast %157 : vector<4x64xf32> to vector<1x4x64xf32>
    tpu.vector_store %arg7[%c4, %c0_106, %c0_107], %160 {strides = array<i32>} : memref<5x4x64xf32, #tpu.memory_space<vmem>>, vector<1x4x64xf32>,
    return
  }
}

</mosaic_0001>

<llo_original>
// kernel: custom-call
$region0: #{custom-call}
  %s0 = inlined_call_operand.hbm [shape: c64[4,16], index: 0, kind: input, shape index: {}]
  %s1 = inlined_call_operand.vmem [shape: f32[4,16], index: 1, kind: output, shape index: {}]
  $region1: #{custom-call} parent=0
    #allocation0 [shape = 's32[1]{0}', space=sflag, size = 0x4, scoped, tag = 'scoped memory for custom-call']
    %2 = vsyncpa [#allocation0], 0
    %s3 = sshll.u32 %s1, 4
    %s4 = int_to_ptr.vmem [resolvable:$true] %s3
    %6 = dma.hbm_to_vmem [thread:$0]  %s0, 64, %s4, [#allocation0]
    %7 = dma.done [#allocation0], 64
    %8 = vsyncpa [#allocation0], 1

// kernel: custom-call.1
$region0: #{custom-call.1}
  %s0 = inlined_call_operand.hbm [shape: c64[4,16], index: 0, kind: input, shape index: {}]
  %s1 = inlined_call_operand.vmem [shape: f32[4,16], index: 1, kind: output, shape index: {}]
  %s2 = scalar_lea.hbm %s0, 64
  $region1: #{custom-call.1} parent=0
    #allocation0 [shape = 's32[1]{0}', space=sflag, size = 0x4, scoped, tag = 'scoped memory for custom-call.1']
    %3 = vsyncpa [#allocation0], 0
    %s4 = sshll.u32 %s1, 4
    %s5 = int_to_ptr.vmem [resolvable:$true] %s4
    %7 = dma.hbm_to_vmem [thread:$0]  %s2, 64, %s5, [#allocation0]
    %8 = dma.done [#allocation0], 64
    %9 = vsyncpa [#allocation0], 1

// kernel: custom-call.2
$region0: #{custom-call.2}
  %s0 = inlined_call_operand.vmem [shape: f32[4,5,32], index: 0, kind: input, shape index: {}]
  %s1 = inlined_call_operand.vmem [shape: f32[4,5,32], index: 1, kind: input, shape index: {}]
  %s2 = inlined_call_operand.hbm [shape: c64[4,5,32], index: 2, kind: output, shape index: {}]
  %s3 = scalar_lea.hbm %s2, 320
  $region1: #{custom-call.2} parent=0
    #allocation0 [shape = 's32[1]{0}', space=sflag, size = 0x4, scoped, tag = 'scoped memory for custom-call.2']
    %4 = vsyncpa [#allocation0], 0
    %s5 = sshll.u32 %s0, 4
    %s6 = int_to_ptr.vmem [resolvable:$true] %s5
    %8 = dma.vmem_to_hbm [thread:$0]  %s6, 320, %s2, [#allocation0]
    %9 = dma.done [#allocation0], 320
    %10 = vsyncpa [#allocation0], 1
  $region2: #{custom-call.2} parent=0
    #allocation1 [shape = 's32[1]{0}', space=sflag, size = 0x4, scoped, tag = 'scoped memory for custom-call.2']
    %11 = vsyncpa [#allocation1], 0
    %s12 = sshll.u32 %s1, 4
    %s13 = int_to_ptr.vmem [resolvable:$true] %s12
    %15 = dma.vmem_to_hbm [thread:$0]  %s13, 320, %s3, [#allocation1]
    %16 = dma.done [#allocation1], 320
    %17 = vsyncpa [#allocation1], 1

// kernel: srel_vary_eta_forward.1
$region0: #{srel_vary_eta_forward.1}
  #allocation0 [shape = 'u32[]', space=smem, size = 0x4, offset = 0x4, fixed_abs, tag = 'smem constant byte address 0x4 - core index']
  #allocation1 [shape = 'u32[144,128]{1,0:T(1,128)}', space=vmem, size = 0x12000, scoped, tag = 'internal scratch']
  %s0 = inlined_call_operand.vmem [shape: f32[4,32], index: 0, kind: input, shape index: {}]
  %s1 = inlined_call_operand.vmem [shape: f32[4,64,64], index: 1, kind: input, shape index: {}]
  %s2 = inlined_call_operand.vmem [shape: f32[4,4,64], index: 2, kind: input, shape index: {}]
  %s3 = inlined_call_operand.vmem [shape: f32[4,64,32], index: 3, kind: input, shape index: {}]
  %s4 = inlined_call_operand.vmem [shape: f32[4,1,32], index: 4, kind: input, shape index: {}]
  %s5 = inlined_call_operand.vmem [shape: f32[4,1,64], index: 5, kind: input, shape index: {}]
  %s6 = inlined_call_operand.vmem [shape: f32[4], index: 6, kind: input, shape index: {}]
  %s7 = inlined_call_operand.vmem [shape: f32[5,4,64], index: 7, kind: output, shape index: {0}]
  %s8 = inlined_call_operand.vmem [shape: f32[4,4,32], index: 8, kind: output, shape index: {1}]
  %9 = xla_tuple %s7, %s8
  %s10 = sld [smem:[#allocation0]]
  $region50: #{srel_vary_eta_forward.1} parent=0
    _
  %s12 = ssub.s32 1, %s10
  %s13 = scalar_select 0, %s12, %s10
  $region1: #{srel_vary_eta_forward.1} parent=0
    #allocation2 [shape = 'u8[512]{0}', space=smem, size = 0x200, scoped, tag = 'input window, operand 6, single buffered']
    #allocation3 [shape = 's32[1]{0}', space=sflag, size = 0x4, scoped, tag = 'scoped memory for srel_vary_eta_forward.1']
    %14 = vsyncpa [#allocation3], 0
    // Predicated region
    $region2: #{srel_vary_eta_forward.1} parent=1 // pred_check
      _
    $region3: #{srel_vary_eta_forward.1} parent=1 // pred_check_branch
      %16 = sbr.rel (0) target = $region5
    $region4: #{srel_vary_eta_forward.1} parent=1 // pred_region
      _
    $region5: #{srel_vary_eta_forward.1} parent=1 // pred_fallthru
      _
    // Predicated region
    $region6: #{srel_vary_eta_forward.1} parent=1 // pred_check
      _
    $region7: #{srel_vary_eta_forward.1} parent=1 // pred_check_branch
      %18 = sbr.rel (0) target = $region9
    $region8: #{srel_vary_eta_forward.1} parent=1 // pred_region
      _
    $region9: #{srel_vary_eta_forward.1} parent=1 // pred_fallthru
      _
    // Predicated region
    $region10: #{srel_vary_eta_forward.1} parent=1 // pred_check
      _
    $region11: #{srel_vary_eta_forward.1} parent=1 // pred_check_branch
      %20 = sbr.rel (0) target = $region13
    $region12: #{srel_vary_eta_forward.1} parent=1 // pred_region
      _
    $region13: #{srel_vary_eta_forward.1} parent=1 // pred_fallthru
      _
    // Predicated region
    $region14: #{srel_vary_eta_forward.1} parent=1 // pred_check
      _
    $region15: #{srel_vary_eta_forward.1} parent=1 // pred_check_branch
      %22 = sbr.rel (0) target = $region17
    $region16: #{srel_vary_eta_forward.1} parent=1 // pred_region
      _
    $region17: #{srel_vary_eta_forward.1} parent=1 // pred_fallthru
      _
    // Predicated region
    $region18: #{srel_vary_eta_forward.1} parent=1 // pred_check
      _
    $region19: #{srel_vary_eta_forward.1} parent=1 // pred_check_branch
      %24 = sbr.rel (0) target = $region21
    $region20: #{srel_vary_eta_forward.1} parent=1 // pred_region
      _
    $region21: #{srel_vary_eta_forward.1} parent=1 // pred_fallthru
      _
    // Predicated region
    $region22: #{srel_vary_eta_forward.1} parent=1 // pred_check
      _
    $region23: #{srel_vary_eta_forward.1} parent=1 // pred_check_branch
      %26 = sbr.rel (0) target = $region25
    $region24: #{srel_vary_eta_forward.1} parent=1 // pred_region
      _
    $region25: #{srel_vary_eta_forward.1} parent=1 // pred_fallthru
      _
    // Predicated region
    $region26: #{srel_vary_eta_forward.1} parent=1 // pred_check
      _
    $region27: #{srel_vary_eta_forward.1} parent=1 // pred_check_branch
      %28 = sbr.rel (0) target = $region29
    $region28: #{srel_vary_eta_forward.1} parent=1 // pred_region
      %s30 = ssub.s32 16, 16
      %31 = vsyncadd [#allocation3], %s30
      %s33 = sshll.u32 %s6, 4
      %s34 = int_to_ptr.vmem [resolvable:$true] %s33
      %36 = dma.vmem_to_smem %s34, 16, [#allocation2], [#allocation3]
    $region29: #{srel_vary_eta_forward.1} parent=1 // pred_fallthru
      _
    // Predicated region
    $region30: #{srel_vary_eta_forward.1} parent=1 // pred_check
      _
    $region31: #{srel_vary_eta_forward.1} parent=1 // pred_check_branch
      %38 = sbr.rel (0) target = $region33
    $region32: #{srel_vary_eta_forward.1} parent=1 // pred_region
      %39 = dma.done [#allocation3], 16
    $region33: #{srel_vary_eta_forward.1} parent=1 // pred_fallthru
      _
    %40 = sfence
    %v41 = vld [vmem:[%s0] sm:$0xf]
    %v42 = vand.u32 2147483647, %v41
    %vm43 = vcmp.le.f32.partialorder %v42, 0.7853982
    %vm44 = vcmp.lt.s32.totalorder %v41, 0
    %v45 = vand.u32 %v41, 2139095040
    %v46 = vshrl.u32 %v45, 23
    %v47 = vsub.s32 %v46, 127
    %v48 = vand.u32 2147483647, %v41
    %v49 = vand.u32 %v48, 8388607
    %v50 = vor.u32 %v49, 8388608
    %v51 = vsub.s32 0, %v50
    %v52 = vadd.s32 %v47, 1
    %vm53 = vcmp.gt.s32.totalorder %v52, 0
    %v54 = vsel %vm53, %v52, 0
    %v55 = vshrl.u32 %v54, 5
    %v56 = vand.u32 %v54, 31
    %v57 = vsub.s32 32, %v56
    %v58 = vshrl.u32 683565275, %v57
    %v59 = vshll.u32 683565275, %v56
    %v60 = vshrl.u32 2475754826, %v57
    %v61 = vor.u32 %v59, %v60
    %v62 = vshll.u32 2475754826, %v56
    %v63 = vshrl.u32 2131351028, %v57
    %v64 = vor.u32 %v62, %v63
    %v65 = vshll.u32 2131351028, %v56
    %v66 = vshrl.u32 2102212464, %v57
    %v67 = vor.u32 %v65, %v66
    %v68 = vshll.u32 2102212464, %v56
    %v69 = vshrl.u32 920167782, %v57
    %v70 = vor.u32 %v68, %v69
    %v71 = vshll.u32 920167782, %v56
    %v72 = vshrl.u32 1326507024, %v57
    %v73 = vor.u32 %v71, %v72
    %vm74 = vcmp.lt.s32.totalorder %v55, 1
    %vm75 = vcmp.lt.s32.totalorder %v55, 2
    %vm76 = vcmp.lt.s32.totalorder %v55, 3
    %vm77 = vcmp.lt.s32.totalorder %v55, 4
    %v78 = vsel %vm74, %v58, %v61
    %v79 = vsel %vm77, %v67, 2102212464
    %v80 = vsel %vm76, %v64, %v79
    %v81 = vsel %vm75, %v78, %v80
    %v82 = vsel %vm74, %v61, %v64
    %v83 = vsel %vm77, %v70, 920167782
    %v84 = vsel %vm76, %v67, %v83
    %v85 = vsel %vm75, %v82, %v84
    %v86 = vsel %vm74, %v64, %v67
    %v87 = vsel %vm77, %v73, 1326507024
    %v88 = vsel %vm76, %v70, %v87
    %v89 = vsel %vm75, %v86, %v88
    %v90 = vshll.u32 %v50, 8
    %v91 = vmul.u32.u64.compose %v90, %v89
    %v92 = vextract.low.u32 %v91
    %v93 = vextract.high.u32 %v91
    %v94 = vmul.u32.u64.compose %v90, %v85
    %v95 = vextract.low.u32 %v94
    %v96 = vextract.high.u32 %v94
    %v97 = vmul.u32 %v90, %v81
    %v98 = vadd.s32 %v93, %v95
    %vm99 = vc.u32 %v93, %v95
    %v100 = vadd.s32 %v96, 1
    %v101 = vsel %vm99, %v100, %v96
    %v102 = vadd.s32 %v97, %v101
    %v103 = vadd.s32 %v102, 536870912
    %v104 = vshrl.u32 %v103, 30
    %v105 = vshll.u32 %v104, 30
    %v106 = vsub.s32 %v102, %v105
    %vm107 = vcmp.lt.s32.totalorder %v106, 0
    %v108 = vsub.s32 0, %v106
    %v109 = vsel %vm107, %v108, %v106
    %v110 = vclz %v109
    %v111 = vsub.s32 %v110, 2
    %vm112 = vcmp.gt.s32.totalorder 0, %v111
    %v113 = vsel %vm112, 0, %v111
    %v114 = vsub.s32 32, %v113
    %v115 = vshll.u32 %v106, %v113
    %v116 = vshrl.u32 %v98, %v114
    %v117 = vor.u32 %v115, %v116
    %v118 = vsub.s32 4294967266, %v113
    %v119 = vadd.s32 %v118, 127
    %v120 = vshll.u32 %v119, 23
    %v121 = vor.u32 4788187, %v120
    %v122 = vand.u32 2147483647, %v121
    %v124 = vcvt.s32.f32 %v117
    %v125 = vmul.f32 %v124, %v122
    %v126 = vxor.u32 %v125, 2147483648
    %v127 = vsel %vm44, %v126, %v125
    %v128 = vsub.s32 4, %v104
    %v129 = vsel %vm44, %v128, %v104
    %v130 = vsel %vm43, %v41, %v127
    %v131 = vsel %vm43, 0, %v129
    %v132 = vcosq.f32.pop %v130
    %v133 = vsinq.f32.pop %v130
    %vm134 = vweird.f32 %v41
    %v135 = vand.u32 %v131, 3
    %vm136 = vcmp.lt.s32.totalorder %v135, 2
    %vm137 = vcmp.eq.s32.totalorder %v135, 0
    %v138 = vxor.u32 %v133, 2147483648
    %v139 = vsel %vm137, %v132, %v138
    %vm140 = vcmp.eq.s32.totalorder %v135, 2
    %v141 = vxor.u32 %v132, 2147483648
    %v142 = vsel %vm140, %v141, %v133
    %v143 = vsel %vm136, %v139, %v142
    %v144 = vsel %vm134, nan, %v143
    %v145 = vand.u32 2147483647, %v41
    %vm146 = vcmp.le.f32.partialorder %v145, 0.7853982
    %vm147 = vcmp.lt.s32.totalorder %v41, 0
    %v148 = vand.u32 %v41, 2139095040
    %v149 = vshrl.u32 %v148, 23
    %v150 = vsub.s32 %v149, 127
    %v151 = vand.u32 2147483647, %v41
    %v152 = vand.u32 %v151, 8388607
    %v153 = vor.u32 %v152, 8388608
    %v154 = vsub.s32 0, %v153
    %v155 = vadd.s32 %v150, 1
    %vm156 = vcmp.gt.s32.totalorder %v155, 0
    %v157 = vsel %vm156, %v155, 0
    %v158 = vshrl.u32 %v157, 5
    %v159 = vand.u32 %v157, 31
    %v160 = vsub.s32 32, %v159
    %v161 = vshrl.u32 683565275, %v160
    %v162 = vshll.u32 683565275, %v159
    %v163 = vshrl.u32 2475754826, %v160
    %v164 = vor.u32 %v162, %v163
    %v165 = vshll.u32 2475754826, %v159
    %v166 = vshrl.u32 2131351028, %v160
    %v167 = vor.u32 %v165, %v166
    %v168 = vshll.u32 2131351028, %v159
    %v169 = vshrl.u32 2102212464, %v160
    %v170 = vor.u32 %v168, %v169
    %v171 = vshll.u32 2102212464, %v159
    %v172 = vshrl.u32 920167782, %v160
    %v173 = vor.u32 %v171, %v172
    %v174 = vshll.u32 920167782, %v159
    %v175 = vshrl.u32 1326507024, %v160
    %v176 = vor.u32 %v174, %v175
    %vm177 = vcmp.lt.s32.totalorder %v158, 1
    %vm178 = vcmp.lt.s32.totalorder %v158, 2
    %vm179 = vcmp.lt.s32.totalorder %v158, 3
    %vm180 = vcmp.lt.s32.totalorder %v158, 4
    %v181 = vsel %vm177, %v161, %v164
    %v182 = vsel %vm180, %v170, 2102212464
    %v183 = vsel %vm179, %v167, %v182
    %v184 = vsel %vm178, %v181, %v183
    %v185 = vsel %vm177, %v164, %v167
    %v186 = vsel %vm180, %v173, 920167782
    %v187 = vsel %vm179, %v170, %v186
    %v188 = vsel %vm178, %v185, %v187
    %v189 = vsel %vm177, %v167, %v170
    %v190 = vsel %vm180, %v176, 1326507024
    %v191 = vsel %vm179, %v173, %v190
    %v192 = vsel %vm178, %v189, %v191
    %v193 = vshll.u32 %v153, 8
    %v194 = vmul.u32.u64.compose %v193, %v192
    %v195 = vextract.low.u32 %v194
    %v196 = vextract.high.u32 %v194
    %v197 = vmul.u32.u64.compose %v193, %v188
    %v198 = vextract.low.u32 %v197
    %v199 = vextract.high.u32 %v197
    %v200 = vmul.u32 %v193, %v184
    %v201 = vadd.s32 %v196, %v198
    %vm202 = vc.u32 %v196, %v198
    %v203 = vadd.s32 %v199, 1
    %v204 = vsel %vm202, %v203, %v199
    %v205 = vadd.s32 %v200, %v204
    %v206 = vadd.s32 %v205, 536870912
    %v207 = vshrl.u32 %v206, 30
    %v208 = vshll.u32 %v207, 30
    %v209 = vsub.s32 %v205, %v208
    %vm210 = vcmp.lt.s32.totalorder %v209, 0
    %v211 = vsub.s32 0, %v209
    %v212 = vsel %vm210, %v211, %v209
    %v213 = vclz %v212
    %v214 = vsub.s32 %v213, 2
    %vm215 = vcmp.gt.s32.totalorder 0, %v214
    %v216 = vsel %vm215, 0, %v214
    %v217 = vsub.s32 32, %v216
    %v218 = vshll.u32 %v209, %v216
    %v219 = vshrl.u32 %v201, %v217
    %v220 = vor.u32 %v218, %v219
    %v221 = vsub.s32 4294967266, %v216
    %v222 = vadd.s32 %v221, 127
    %v223 = vshll.u32 %v222, 23
    %v224 = vor.u32 4788187, %v223
    %v225 = vand.u32 2147483647, %v224
    %v227 = vcvt.s32.f32 %v220
    %v228 = vmul.f32 %v227, %v225
    %v229 = vxor.u32 %v228, 2147483648
    %v230 = vsel %vm147, %v229, %v228
    %v231 = vsub.s32 4, %v207
    %v232 = vsel %vm147, %v231, %v207
    %v233 = vsel %vm146, %v41, %v230
    %v234 = vsel %vm146, 0, %v232
    %v235 = vcosq.f32.pop %v233
    %v236 = vsinq.f32.pop %v233
    %vm237 = vweird.f32 %v41
    %v238 = vadd.s32 %v234, 3
    %v239 = vand.u32 %v238, 3
    %vm240 = vcmp.lt.s32.totalorder %v239, 2
    %vm241 = vcmp.eq.s32.totalorder %v239, 0
    %v242 = vxor.u32 %v236, 2147483648
    %v243 = vsel %vm241, %v235, %v242
    %vm244 = vcmp.eq.s32.totalorder %v239, 2
    %v245 = vxor.u32 %v235, 2147483648
    %v246 = vsel %vm244, %v245, %v236
    %v247 = vsel %vm240, %v243, %v246
    %v248 = vsel %vm237, nan, %v247
    %250 = vrot.lane.b32.xlu0 %v248, 32
    %v251 = vpop.permute.xlu0 %250
    %vm253 = vcmask 261120
    %v254 = vsel %vm253, %v144, %v251
    %v255 = vld [vmem:[%s1] sm:$0xff]
    %v256 = vld [vmem:[%s1 + $0x8] sm:$0xff]
    %v257 = vld [vmem:[%s1 + $0x10] sm:$0xff]
    %v258 = vld [vmem:[%s1 + $0x18] sm:$0xff]
    %v259 = vld [vmem:[%s1 + $0x20] sm:$0xff]
    %v260 = vld [vmem:[%s1 + $0x28] sm:$0xff]
    %v261 = vld [vmem:[%s1 + $0x30] sm:$0xff]
    %v262 = vld [vmem:[%s1 + $0x38] sm:$0xff]
    %v263 = vld [vmem:[%s2] sm:$0xf]
    %vm264 = vcmask 523264
    %v266 = vsel %vm264, %v254, 0
    %268 = vmatprep.subr.mxu0 0.0
    %269 = vmatpush1.msra.mxu0 %v255
    %270 = vmatprep.subr.mxu0 0.0
    %271 = vmatpush1.msra.mxu0 %v256
    %272 = vmatprep.subr.mxu0 0.0
    %273 = vmatpush1.msra.mxu0 %v257
    %274 = vmatprep.subr.mxu0 0.0
    %275 = vmatpush1.msra.mxu0 %v258
    %276 = vmatprep.subr.mxu0 0.0
    %277 = vmatpush1.msra.mxu0 %v259
    %278 = vmatprep.subr.mxu0 0.0
    %279 = vmatpush1.msra.mxu0 %v260
    %280 = vmatprep.subr.mxu0 0.0
    %281 = vmatpush1.msra.mxu0 %v261
    %282 = vmatprep.subr.mxu0 0.0
    %283 = vmatpush1.msra.mxu0 %v262
    %284 = vmatprep.subr.mxu0 0.0
    %285 = vmatpush1.msra.mxu0 0.0
    %286 = vmatprep.subr.mxu0 0.0
    %287 = vmatpush1.msra.mxu0 0.0
    %288 = vmatprep.subr.mxu0 0.0
    %289 = vmatpush1.msra.mxu0 0.0
    %290 = vmatprep.subr.mxu0 0.0
    %291 = vmatpush1.msra.mxu0 0.0
    %292 = vmatprep.subr.mxu0 0.0
    %293 = vmatpush1.msra.mxu0 0.0
    %294 = vmatprep.subr.mxu0 0.0
    %295 = vmatpush1.msra.mxu0 0.0
    %296 = vmatprep.subr.mxu0 0.0
    %297 = vmatpush1.msra.mxu0 0.0
    %298 = vmatprep.subr.mxu0 0.0
    %299 = vmatpush1.msra.mxu0 0.0
    %300 = vmatprep.subr.mxu0 0.0
    %301 = vmatpush1.msra.mxu0 0.0
    %302 = vmatprep.subr.mxu0 0.0
    %303 = vmatpush1.msra.mxu0 0.0
    %304 = vmatprep.subr.mxu0 0.0
    %305 = vmatpush1.msra.mxu0 0.0
    %306 = vmatprep.subr.mxu0 0.0
    %307 = vmatpush1.msra.mxu0 0.0
    %308 = vmatprep.subr.mxu0 0.0
    %309 = vmatpush1.msra.mxu0 0.0
    %310 = vmatprep.subr.mxu0 0.0
    %311 = vmatpush1.msra.mxu0 0.0
    %312 = vmatprep.subr.mxu0 0.0
    %313 = vmatpush1.msra.mxu0 0.0
    %314 = vmatprep.subr.mxu0 0.0
    %315 = vmatpush1.msra.mxu0 0.0
    %316 = vmatprep.subr.mxu0 0.0
    %317 = vmatpush1.msra.mxu0 0.0
    %318 = vmatprep.subr.mxu0 0.0
    %319 = vmatpush1.msra.mxu0 0.0
    %320 = vmatprep.subr.mxu0 0.0
    %321 = vmatpush1.msra.mxu0 0.0
    %322 = vmatprep.subr.mxu0 0.0
    %323 = vmatpush1.msra.mxu0 0.0
    %324 = vmatprep.subr.mxu0 0.0
    %325 = vmatpush1.msra.mxu0 0.0
    %326 = vmatprep.subr.mxu0 0.0
    %327 = vmatpush1.msra.mxu0 0.0
    %328 = vmatprep.subr.mxu0 0.0
    %329 = vmatpush1.msra.mxu0 0.0
    %330 = vmatprep.subr.mxu0 0.0
    %331 = vmatpush1.msra.mxu0 0.0
    %332 = vmatprep.mubr.f32.mxu0 0.0
    %333 = vmatmul.mubr.f32.gmra.mrb[0].mxu0 %v266
    %v334 = vpop.f32.mrb[0].mxu0
    %v335 = vadd.f32 %v263, %v334
    %v336 = vpop.f32.mrb[0].mxu0
    %337 = vdwg.mxu0
    %v338 = vmax.f32 %v335, 0.0
    %v339 = vld [vmem:[%s3] sm:$0xff]
    %v340 = vld [vmem:[%s3 + $0x8] sm:$0xff]
    %v341 = vld [vmem:[%s3 + $0x10] sm:$0xff]
    %v342 = vld [vmem:[%s3 + $0x18] sm:$0xff]
    %v343 = vld [vmem:[%s3 + $0x20] sm:$0xff]
    %v344 = vld [vmem:[%s3 + $0x28] sm:$0xff]
    %v345 = vld [vmem:[%s3 + $0x30] sm:$0xff]
    %v346 = vld [vmem:[%s3 + $0x38] sm:$0xff]
    %v347 = vld [vmem:[%s4] sm:$0x1]
    %v349 = vlaneseq
    %v350 = vshrl.u32 %v349, 7
    %v351 = vsub.s32 0, %v350
    %v352 = vrot.slane %v347, %v351
    %v355 = vsel %vm264, %v338, 0
    %357 = vmatprep.subr.mxu0 0.0
    %358 = vmatpush1.msra.mxu0 %v339
    %359 = vmatprep.subr.mxu0 0.0
    %360 = vmatpush1.msra.mxu0 %v340
    %361 = vmatprep.subr.mxu0 0.0
    %362 = vmatpush1.msra.mxu0 %v341
    %363 = vmatprep.subr.mxu0 0.0
    %364 = vmatpush1.msra.mxu0 %v342
    %365 = vmatprep.subr.mxu0 0.0
    %366 = vmatpush1.msra.mxu0 %v343
    %367 = vmatprep.subr.mxu0 0.0
    %368 = vmatpush1.msra.mxu0 %v344
    %369 = vmatprep.subr.mxu0 0.0
    %370 = vmatpush1.msra.mxu0 %v345
    %371 = vmatprep.subr.mxu0 0.0
    %372 = vmatpush1.msra.mxu0 %v346
    %373 = vmatprep.subr.mxu0 0.0
    %374 = vmatpush1.msra.mxu0 0.0
    %375 = vmatprep.subr.mxu0 0.0
    %376 = vmatpush1.msra.mxu0 0.0
    %377 = vmatprep.subr.mxu0 0.0
    %378 = vmatpush1.msra.mxu0 0.0
    %379 = vmatprep.subr.mxu0 0.0
    %380 = vmatpush1.msra.mxu0 0.0
    %381 = vmatprep.subr.mxu0 0.0
    %382 = vmatpush1.msra.mxu0 0.0
    %383 = vmatprep.subr.mxu0 0.0
    %384 = vmatpush1.msra.mxu0 0.0
    %385 = vmatprep.subr.mxu0 0.0
    %386 = vmatpush1.msra.mxu0 0.0
    %387 = vmatprep.subr.mxu0 0.0
    %388 = vmatpush1.msra.mxu0 0.0
    %389 = vmatprep.subr.mxu0 0.0
    %390 = vmatpush1.msra.mxu0 0.0
    %391 = vmatprep.subr.mxu0 0.0
    %392 = vmatpush1.msra.mxu0 0.0
    %393 = vmatprep.subr.mxu0 0.0
    %394 = vmatpush1.msra.mxu0 0.0
    %395 = vmatprep.subr.mxu0 0.0
    %396 = vmatpush1.msra.mxu0 0.0
    %397 = vmatprep.subr.mxu0 0.0
    %398 = vmatpush1.msra.mxu0 0.0
    %399 = vmatprep.subr.mxu0 0.0
    %400 = vmatpush1.msra.mxu0 0.0
    %401 = vmatprep.subr.mxu0 0.0
    %402 = vmatpush1.msra.mxu0 0.0
    %403 = vmatprep.subr.mxu0 0.0
    %404 = vmatpush1.msra.mxu0 0.0
    %405 = vmatprep.subr.mxu0 0.0
    %406 = vmatpush1.msra.mxu0 0.0
    %407 = vmatprep.subr.mxu0 0.0
    %408 = vmatpush1.msra.mxu0 0.0
    %409 = vmatprep.subr.mxu0 0.0
    %410 = vmatpush1.msra.mxu0 0.0
    %411 = vmatprep.subr.mxu0 0.0
    %412 = vmatpush1.msra.mxu0 0.0
    %413 = vmatprep.subr.mxu0 0.0
    %414 = vmatpush1.msra.mxu0 0.0
    %415 = vmatprep.subr.mxu0 0.0
    %416 = vmatpush1.msra.mxu0 0.0
    %417 = vmatprep.subr.mxu0 0.0
    %418 = vmatpush1.msra.mxu0 0.0
    %419 = vmatprep.subr.mxu0 0.0
    %420 = vmatpush1.msra.mxu0 0.0
    %421 = vmatprep.mubr.f32.mxu0 0.0
    %422 = vmatmul.mubr.f32.gmra.mrb[0].mxu0 %v355
    %v423 = vpop.f32.mrb[0].mxu0
    %v424 = vadd.f32 %v352, %v423
    %v425 = vpop.f32.mrb[0].mxu0
    %426 = vdwg.mxu0
    %v427 = vld [vmem:[%s5] sm:$0x1]
    %v429 = vlaneseq
    %v430 = vshrl.u32 %v429, 7
    %v431 = vsub.s32 0, %v430
    %v432 = vrot.slane %v427, %v431
    %v434 = vmul.f32 %v338, %v432
    %vm435 = vcmask 519168
    %v436 = vsel %vm435, %v434, 0.0
    %437 = vadd.xlane.f32.xlu0 %v436
    %v438 = vpop.xlane.xlu0 %437
    %s439 = sld [smem:[#allocation2]]
    %v440 = vstv %s439
    %v441 = vadd.f32 %v438, %v440
    %442 = vst.msk [vmem:[%s7] sm:$0xf] %vm435, %v254
    %vm443 = vcmask 257024
    %444 = vst.msk [vmem:[%s8] sm:$0xf] %vm443, %v424
    %v445 = vmul.f32 %v441, %v424
    %v446 = vsub.f32 %v41, %v445
    %v447 = vand.u32 2147483647, %v446
    %vm448 = vcmp.le.f32.partialorder %v447, 0.7853982
    %vm449 = vcmp.lt.s32.totalorder %v446, 0
    %v450 = vand.u32 %v446, 2139095040
    %v451 = vshrl.u32 %v450, 23
    %v452 = vsub.s32 %v451, 127
    %v453 = vand.u32 2147483647, %v446
    %v454 = vand.u32 %v453, 8388607
    %v455 = vor.u32 %v454, 8388608
    %v456 = vsub.s32 0, %v455
    %v457 = vadd.s32 %v452, 1
    %vm458 = vcmp.gt.s32.totalorder %v457, 0
    %v459 = vsel %vm458, %v457, 0
    %v460 = vshrl.u32 %v459, 5
    %v461 = vand.u32 %v459, 31
    %v462 = vsub.s32 32, %v461
    %v463 = vshrl.u32 683565275, %v462
    %v464 = vshll.u32 683565275, %v461
    %v465 = vshrl.u32 2475754826, %v462
    %v466 = vor.u32 %v464, %v465
    %v467 = vshll.u32 2475754826, %v461
    %v468 = vshrl.u32 2131351028, %v462
    %v469 = vor.u32 %v467, %v468
    %v470 = vshll.u32 2131351028, %v461
    %v471 = vshrl.u32 2102212464, %v462
    %v472 = vor.u32 %v470, %v471
    %v473 = vshll.u32 2102212464, %v461
    %v474 = vshrl.u32 920167782, %v462
    %v475 = vor.u32 %v473, %v474
    %v476 = vshll.u32 920167782, %v461
    %v477 = vshrl.u32 1326507024, %v462
    %v478 = vor.u32 %v476, %v477
    %vm479 = vcmp.lt.s32.totalorder %v460, 1
    %vm480 = vcmp.lt.s32.totalorder %v460, 2
    %vm481 = vcmp.lt.s32.totalorder %v460, 3
    %vm482 = vcmp.lt.s32.totalorder %v460, 4
    %v483 = vsel %vm479, %v463, %v466
    %v484 = vsel %vm482, %v472, 2102212464
    %v485 = vsel %vm481, %v469, %v484
    %v486 = vsel %vm480, %v483, %v485
    %v487 = vsel %vm479, %v466, %v469
    %v488 = vsel %vm482, %v475, 920167782
    %v489 = vsel %vm481, %v472, %v488
    %v490 = vsel %vm480, %v487, %v489
    %v491 = vsel %vm479, %v469, %v472
    %v492 = vsel %vm482, %v478, 1326507024
    %v493 = vsel %vm481, %v475, %v492
    %v494 = vsel %vm480, %v491, %v493
    %v495 = vshll.u32 %v455, 8
    %v496 = vmul.u32.u64.compose %v495, %v494
    %v497 = vextract.low.u32 %v496
    %v498 = vextract.high.u32 %v496
    %v499 = vmul.u32.u64.compose %v495, %v490
    %v500 = vextract.low.u32 %v499
    %v501 = vextract.high.u32 %v499
    %v502 = vmul.u32 %v495, %v486
    %v503 = vadd.s32 %v498, %v500
    %vm504 = vc.u32 %v498, %v500
    %v505 = vadd.s32 %v501, 1
    %v506 = vsel %vm504, %v505, %v501
    %v507 = vadd.s32 %v502, %v506
    %v508 = vadd.s32 %v507, 536870912
    %v509 = vshrl.u32 %v508, 30
    %v510 = vshll.u32 %v509, 30
    %v511 = vsub.s32 %v507, %v510
    %vm512 = vcmp.lt.s32.totalorder %v511, 0
    %v513 = vsub.s32 0, %v511
    %v514 = vsel %vm512, %v513, %v511
    %v515 = vclz %v514
    %v516 = vsub.s32 %v515, 2
    %vm517 = vcmp.gt.s32.totalorder 0, %v516
    %v518 = vsel %vm517, 0, %v516
    %v519 = vsub.s32 32, %v518
    %v520 = vshll.u32 %v511, %v518
    %v521 = vshrl.u32 %v503, %v519
    %v522 = vor.u32 %v520, %v521
    %v523 = vsub.s32 4294967266, %v518
    %v524 = vadd.s32 %v523, 127
    %v525 = vshll.u32 %v524, 23
    %v526 = vor.u32 4788187, %v525
    %v527 = vand.u32 2147483647, %v526
    %v529 = vcvt.s32.f32 %v522
    %v530 = vmul.f32 %v529, %v527
    %v531 = vxor.u32 %v530, 2147483648
    %v532 = vsel %vm449, %v531, %v530
    %v533 = vsub.s32 4, %v509
    %v534 = vsel %vm449, %v533, %v509
    %v535 = vsel %vm448, %v446, %v532
    %v536 = vsel %vm448, 0, %v534
    %v537 = vcosq.f32.pop %v535
    %v538 = vsinq.f32.pop %v535
    %vm539 = vweird.f32 %v446
    %v540 = vand.u32 %v536, 3
    %vm541 = vcmp.lt.s32.totalorder %v540, 2
    %vm542 = vcmp.eq.s32.totalorder %v540, 0
    %v543 = vxor.u32 %v538, 2147483648
    %v544 = vsel %vm542, %v537, %v543
    %vm545 = vcmp.eq.s32.totalorder %v540, 2
    %v546 = vxor.u32 %v537, 2147483648
    %v547 = vsel %vm545, %v546, %v538
    %v548 = vsel %vm541, %v544, %v547
    %v549 = vsel %vm539, nan, %v548
    %v550 = vand.u32 2147483647, %v446
    %vm551 = vcmp.le.f32.partialorder %v550, 0.7853982
    %vm552 = vcmp.lt.s32.totalorder %v446, 0
    %v553 = vand.u32 %v446, 2139095040
    %v554 = vshrl.u32 %v553, 23
    %v555 = vsub.s32 %v554, 127
    %v556 = vand.u32 2147483647, %v446
    %v557 = vand.u32 %v556, 8388607
    %v558 = vor.u32 %v557, 8388608
    %v559 = vsub.s32 0, %v558
    %v560 = vadd.s32 %v555, 1
    %vm561 = vcmp.gt.s32.totalorder %v560, 0
    %v562 = vsel %vm561, %v560, 0
    %v563 = vshrl.u32 %v562, 5
    %v564 = vand.u32 %v562, 31
    %v565 = vsub.s32 32, %v564
    %v566 = vshrl.u32 683565275, %v565
    %v567 = vshll.u32 683565275, %v564
    %v568 = vshrl.u32 2475754826, %v565
    %v569 = vor.u32 %v567, %v568
    %v570 = vshll.u32 2475754826, %v564
    %v571 = vshrl.u32 2131351028, %v565
    %v572 = vor.u32 %v570, %v571
    %v573 = vshll.u32 2131351028, %v564
    %v574 = vshrl.u32 2102212464, %v565
    %v575 = vor.u32 %v573, %v574
    %v576 = vshll.u32 2102212464, %v564
    %v577 = vshrl.u32 920167782, %v565
    %v578 = vor.u32 %v576, %v577
    %v579 = vshll.u32 920167782, %v564
    %v580 = vshrl.u32 1326507024, %v565
    %v581 = vor.u32 %v579, %v580
    %vm582 = vcmp.lt.s32.totalorder %v563, 1
    %vm583 = vcmp.lt.s32.totalorder %v563, 2
    %vm584 = vcmp.lt.s32.totalorder %v563, 3
    %vm585 = vcmp.lt.s32.totalorder %v563, 4
    %v586 = vsel %vm582, %v566, %v569
    %v587 = vsel %vm585, %v575, 2102212464
    %v588 = vsel %vm584, %v572, %v587
    %v589 = vsel %vm583, %v586, %v588
    %v590 = vsel %vm582, %v569, %v572
    %v591 = vsel %vm585, %v578, 920167782
    %v592 = vsel %vm584, %v575, %v591
    %v593 = vsel %vm583, %v590, %v592
    %v594 = vsel %vm582, %v572, %v575
    %v595 = vsel %vm585, %v581, 1326507024
    %v596 = vsel %vm584, %v578, %v595
    %v597 = vsel %vm583, %v594, %v596
    %v598 = vshll.u32 %v558, 8
    %v599 = vmul.u32.u64.compose %v598, %v597
    %v600 = vextract.low.u32 %v599
    %v601 = vextract.high.u32 %v599
    %v602 = vmul.u32.u64.compose %v598, %v593
    %v603 = vextract.low.u32 %v602
    %v604 = vextract.high.u32 %v602
    %v605 = vmul.u32 %v598, %v589
    %v606 = vadd.s32 %v601, %v603
    %vm607 = vc.u32 %v601, %v603
    %v608 = vadd.s32 %v604, 1
    %v609 = vsel %vm607, %v608, %v604
    %v610 = vadd.s32 %v605, %v609
    %v611 = vadd.s32 %v610, 536870912
    %v612 = vshrl.u32 %v611, 30
    %v613 = vshll.u32 %v612, 30
    %v614 = vsub.s32 %v610, %v613
    %vm615 = vcmp.lt.s32.totalorder %v614, 0
    %v616 = vsub.s32 0, %v614
    %v617 = vsel %vm615, %v616, %v614
    %v618 = vclz %v617
    %v619 = vsub.s32 %v618, 2
    %vm620 = vcmp.gt.s32.totalorder 0, %v619
    %v621 = vsel %vm620, 0, %v619
    %v622 = vsub.s32 32, %v621
    %v623 = vshll.u32 %v614, %v621
    %v624 = vshrl.u32 %v606, %v622
    %v625 = vor.u32 %v623, %v624
    %v626 = vsub.s32 4294967266, %v621
    %v627 = vadd.s32 %v626, 127
    %v628 = vshll.u32 %v627, 23
    %v629 = vor.u32 4788187, %v628
    %v630 = vand.u32 2147483647, %v629
    %v632 = vcvt.s32.f32 %v625
    %v633 = vmul.f32 %v632, %v630
    %v634 = vxor.u32 %v633, 2147483648
    %v635 = vsel %vm552, %v634, %v633
    %v636 = vsub.s32 4, %v612
    %v637 = vsel %vm552, %v636, %v612
    %v638 = vsel %vm551, %v446, %v635
    %v639 = vsel %vm551, 0, %v637
    %v640 = vcosq.f32.pop %v638
    %v641 = vsinq.f32.pop %v638
    %vm642 = vweird.f32 %v446
    %v643 = vadd.s32 %v639, 3
    %v644 = vand.u32 %v643, 3
    %vm645 = vcmp.lt.s32.totalorder %v644, 2
    %vm646 = vcmp.eq.s32.totalorder %v644, 0
    %v647 = vxor.u32 %v641, 2147483648
    %v648 = vsel %vm646, %v640, %v647
    %vm649 = vcmp.eq.s32.totalorder %v644, 2
    %v650 = vxor.u32 %v640, 2147483648
    %v651 = vsel %vm649, %v650, %v641
    %v652 = vsel %vm645, %v648, %v651
    %v653 = vsel %vm642, nan, %v652
    %655 = vrot.lane.b32.xlu0 %v653, 32
    %v656 = vpop.permute.xlu0 %655
    %v658 = vsel %vm253, %v549, %v656
    %s659 = scalar_lea.vmem %s1, 64
    %v660 = vld [vmem:[%s659] sm:$0xff]
    %v661 = vld [vmem:[%s659 + $0x8] sm:$0xff]
    %v662 = vld [vmem:[%s659 + $0x10] sm:$0xff]
    %v663 = vld [vmem:[%s659 + $0x18] sm:$0xff]
    %v664 = vld [vmem:[%s659 + $0x20] sm:$0xff]
    %v665 = vld [vmem:[%s659 + $0x28] sm:$0xff]
    %v666 = vld [vmem:[%s659 + $0x30] sm:$0xff]
    %v667 = vld [vmem:[%s659 + $0x38] sm:$0xff]
    %s668 = scalar_lea.vmem %s2, 4
    %v669 = vld [vmem:[%s668] sm:$0xf]
    %v671 = vsel %vm264, %v658, 0
    %673 = vmatprep.subr.mxu0 0.0
    %674 = vmatpush1.msra.mxu0 %v660
    %675 = vmatprep.subr.mxu0 0.0
    %676 = vmatpush1.msra.mxu0 %v661
    %677 = vmatprep.subr.mxu0 0.0
    %678 = vmatpush1.msra.mxu0 %v662
    %679 = vmatprep.subr.mxu0 0.0
    %680 = vmatpush1.msra.mxu0 %v663
    %681 = vmatprep.subr.mxu0 0.0
    %682 = vmatpush1.msra.mxu0 %v664
    %683 = vmatprep.subr.mxu0 0.0
    %684 = vmatpush1.msra.mxu0 %v665
    %685 = vmatprep.subr.mxu0 0.0
    %686 = vmatpush1.msra.mxu0 %v666
    %687 = vmatprep.subr.mxu0 0.0
    %688 = vmatpush1.msra.mxu0 %v667
    %689 = vmatprep.subr.mxu0 0.0
    %690 = vmatpush1.msra.mxu0 0.0
    %691 = vmatprep.subr.mxu0 0.0
    %692 = vmatpush1.msra.mxu0 0.0
    %693 = vmatprep.subr.mxu0 0.0
    %694 = vmatpush1.msra.mxu0 0.0
    %695 = vmatprep.subr.mxu0 0.0
    %696 = vmatpush1.msra.mxu0 0.0
    %697 = vmatprep.subr.mxu0 0.0
    %698 = vmatpush1.msra.mxu0 0.0
    %699 = vmatprep.subr.mxu0 0.0
    %700 = vmatpush1.msra.mxu0 0.0
    %701 = vmatprep.subr.mxu0 0.0
    %702 = vmatpush1.msra.mxu0 0.0
    %703 = vmatprep.subr.mxu0 0.0
    %704 = vmatpush1.msra.mxu0 0.0
    %705 = vmatprep.subr.mxu0 0.0
    %706 = vmatpush1.msra.mxu0 0.0
    %707 = vmatprep.subr.mxu0 0.0
    %708 = vmatpush1.msra.mxu0 0.0
    %709 = vmatprep.subr.mxu0 0.0
    %710 = vmatpush1.msra.mxu0 0.0
    %711 = vmatprep.subr.mxu0 0.0
    %712 = vmatpush1.msra.mxu0 0.0
    %713 = vmatprep.subr.mxu0 0.0
    %714 = vmatpush1.msra.mxu0 0.0
    %715 = vmatprep.subr.mxu0 0.0
    %716 = vmatpush1.msra.mxu0 0.0
    %717 = vmatprep.subr.mxu0 0.0
    %718 = vmatpush1.msra.mxu0 0.0
    %719 = vmatprep.subr.mxu0 0.0
    %720 = vmatpush1.msra.mxu0 0.0
    %721 = vmatprep.subr.mxu0 0.0
    %722 = vmatpush1.msra.mxu0 0.0
    %723 = vmatprep.subr.mxu0 0.0
    %724 = vmatpush1.msra.mxu0 0.0
    %725 = vmatprep.subr.mxu0 0.0
    %726 = vmatpush1.msra.mxu0 0.0
    %727 = vmatprep.subr.mxu0 0.0
    %728 = vmatpush1.msra.mxu0 0.0
    %729 = vmatprep.subr.mxu0 0.0
    %730 = vmatpush1.msra.mxu0 0.0
    %731 = vmatprep.subr.mxu0 0.0
    %732 = vmatpush1.msra.mxu0 0.0
    %733 = vmatprep.subr.mxu0 0.0
    %734 = vmatpush1.msra.mxu0 0.0
    %735 = vmatprep.subr.mxu0 0.0
    %736 = vmatpush1.msra.mxu0 0.0
    %737 = vmatprep.mubr.f32.mxu0 0.0
    %738 = vmatmul.mubr.f32.gmra.mrb[0].mxu0 %v671
    %v739 = vpop.f32.mrb[0].mxu0
    %v740 = vadd.f32 %v669, %v739
    %v741 = vpop.f32.mrb[0].mxu0
    %742 = vdwg.mxu0
    %v743 = vmax.f32 %v740, 0.0
    %s744 = scalar_lea.vmem %s3, 64
    %v745 = vld [vmem:[%s744] sm:$0xff]
    %v746 = vld [vmem:[%s744 + $0x8] sm:$0xff]
    %v747 = vld [vmem:[%s744 + $0x10] sm:$0xff]
    %v748 = vld [vmem:[%s744 + $0x18] sm:$0xff]
    %v749 = vld [vmem:[%s744 + $0x20] sm:$0xff]
    %v750 = vld [vmem:[%s744 + $0x28] sm:$0xff]
    %v751 = vld [vmem:[%s744 + $0x30] sm:$0xff]
    %v752 = vld [vmem:[%s744 + $0x38] sm:$0xff]
    %s753 = scalar_lea.vmem %s4, 1
    %v754 = vld [vmem:[%s753] sm:$0x1]
    %v756 = vlaneseq
    %v757 = vshrl.u32 %v756, 7
    %v758 = vsub.s32 0, %v757
    %v759 = vrot.slane %v754, %v758
    %v762 = vsel %vm264, %v743, 0
    %764 = vmatprep.subr.mxu0 0.0
    %765 = vmatpush1.msra.mxu0 %v745
    %766 = vmatprep.subr.mxu0 0.0
    %767 = vmatpush1.msra.mxu0 %v746
    %768 = vmatprep.subr.mxu0 0.0
    %769 = vmatpush1.msra.mxu0 %v747
    %770 = vmatprep.subr.mxu0 0.0
    %771 = vmatpush1.msra.mxu0 %v748
    %772 = vmatprep.subr.mxu0 0.0
    %773 = vmatpush1.msra.mxu0 %v749
    %774 = vmatprep.subr.mxu0 0.0
    %775 = vmatpush1.msra.mxu0 %v750
    %776 = vmatprep.subr.mxu0 0.0
    %777 = vmatpush1.msra.mxu0 %v751
    %778 = vmatprep.subr.mxu0 0.0
    %779 = vmatpush1.msra.mxu0 %v752
    %780 = vmatprep.subr.mxu0 0.0
    %781 = vmatpush1.msra.mxu0 0.0
    %782 = vmatprep.subr.mxu0 0.0
    %783 = vmatpush1.msra.mxu0 0.0
    %784 = vmatprep.subr.mxu0 0.0
    %785 = vmatpush1.msra.mxu0 0.0
    %786 = vmatprep.subr.mxu0 0.0
    %787 = vmatpush1.msra.mxu0 0.0
    %788 = vmatprep.subr.mxu0 0.0
    %789 = vmatpush1.msra.mxu0 0.0
    %790 = vmatprep.subr.mxu0 0.0
    %791 = vmatpush1.msra.mxu0 0.0
    %792 = vmatprep.subr.mxu0 0.0
    %793 = vmatpush1.msra.mxu0 0.0
    %794 = vmatprep.subr.mxu0 0.0
    %795 = vmatpush1.msra.mxu0 0.0
    %796 = vmatprep.subr.mxu0 0.0
    %797 = vmatpush1.msra.mxu0 0.0
    %798 = vmatprep.subr.mxu0 0.0
    %799 = vmatpush1.msra.mxu0 0.0
    %800 = vmatprep.subr.mxu0 0.0
    %801 = vmatpush1.msra.mxu0 0.0
    %802 = vmatprep.subr.mxu0 0.0
    %803 = vmatpush1.msra.mxu0 0.0
    %804 = vmatprep.subr.mxu0 0.0
    %805 = vmatpush1.msra.mxu0 0.0
    %806 = vmatprep.subr.mxu0 0.0
    %807 = vmatpush1.msra.mxu0 0.0
    %808 = vmatprep.subr.mxu0 0.0
    %809 = vmatpush1.msra.mxu0 0.0
    %810 = vmatprep.subr.mxu0 0.0
    %811 = vmatpush1.msra.mxu0 0.0
    %812 = vmatprep.subr.mxu0 0.0
    %813 = vmatpush1.msra.mxu0 0.0
    %814 = vmatprep.subr.mxu0 0.0
    %815 = vmatpush1.msra.mxu0 0.0
    %816 = vmatprep.subr.mxu0 0.0
    %817 = vmatpush1.msra.mxu0 0.0
    %818 = vmatprep.subr.mxu0 0.0
    %819 = vmatpush1.msra.mxu0 0.0
    %820 = vmatprep.subr.mxu0 0.0
    %821 = vmatpush1.msra.mxu0 0.0
    %822 = vmatprep.subr.mxu0 0.0
    %823 = vmatpush1.msra.mxu0 0.0
    %824 = vmatprep.subr.mxu0 0.0
    %825 = vmatpush1.msra.mxu0 0.0
    %826 = vmatprep.subr.mxu0 0.0
    %827 = vmatpush1.msra.mxu0 0.0
    %828 = vmatprep.mubr.f32.mxu0 0.0
    %829 = vmatmul.mubr.f32.gmra.mrb[0].mxu0 %v762
    %v830 = vpop.f32.mrb[0].mxu0
    %v831 = vadd.f32 %v759, %v830
    %v832 = vpop.f32.mrb[0].mxu0
    %833 = vdwg.mxu0
    %s834 = scalar_lea.vmem %s5, 1
    %v835 = vld [vmem:[%s834] sm:$0x1]
    %v837 = vlaneseq
    %v838 = vshrl.u32 %v837, 7
    %v839 = vsub.s32 0, %v838
    %v840 = vrot.slane %v835, %v839
    %v842 = vmul.f32 %v743, %v840
    %v843 = vsel %vm435, %v842, 0.0
    %844 = vadd.xlane.f32.xlu0 %v843
    %v845 = vpop.xlane.xlu0 %844
    %s846 = sld [smem:[#allocation2 + $0x1]]
    %v847 = vstv %s846
    %v848 = vadd.f32 %v845, %v847
    %s849 = scalar_lea.vmem %s7, 4
    %850 = vst.msk [vmem:[%s849] sm:$0xf] %vm435, %v658
    %s851 = scalar_lea.vmem %s8, 4
    %852 = vst.msk [vmem:[%s851] sm:$0xf] %vm443, %v831
    %v853 = vmul.f32 %v848, %v831
    %v854 = vsub.f32 %v446, %v853
    %v855 = vand.u32 2147483647, %v854
    %vm856 = vcmp.le.f32.partialorder %v855, 0.7853982
    %vm857 = vcmp.lt.s32.totalorder %v854, 0
    %v858 = vand.u32 %v854, 2139095040
    %v859 = vshrl.u32 %v858, 23
    %v860 = vsub.s32 %v859, 127
    %v861 = vand.u32 2147483647, %v854
    %v862 = vand.u32 %v861, 8388607
    %v863 = vor.u32 %v862, 8388608
    %v864 = vsub.s32 0, %v863
    %v865 = vadd.s32 %v860, 1
    %vm866 = vcmp.gt.s32.totalorder %v865, 0
    %v867 = vsel %vm866, %v865, 0
    %v868 = vshrl.u32 %v867, 5
    %v869 = vand.u32 %v867, 31
    %v870 = vsub.s32 32, %v869
    %v871 = vshrl.u32 683565275, %v870
    %v872 = vshll.u32 683565275, %v869
    %v873 = vshrl.u32 2475754826, %v870
    %v874 = vor.u32 %v872, %v873
    %v875 = vshll.u32 2475754826, %v869
    %v876 = vshrl.u32 2131351028, %v870
    %v877 = vor.u32 %v875, %v876
    %v878 = vshll.u32 2131351028, %v869
    %v879 = vshrl.u32 2102212464, %v870
    %v880 = vor.u32 %v878, %v879
    %v881 = vshll.u32 2102212464, %v869
    %v882 = vshrl.u32 920167782, %v870
    %v883 = vor.u32 %v881, %v882
    %v884 = vshll.u32 920167782, %v869
    %v885 = vshrl.u32 1326507024, %v870
    %v886 = vor.u32 %v884, %v885
    %vm887 = vcmp.lt.s32.totalorder %v868, 1
    %vm888 = vcmp.lt.s32.totalorder %v868, 2
    %vm889 = vcmp.lt.s32.totalorder %v868, 3
    %vm890 = vcmp.lt.s32.totalorder %v868, 4
    %v891 = vsel %vm887, %v871, %v874
    %v892 = vsel %vm890, %v880, 2102212464
    %v893 = vsel %vm889, %v877, %v892
    %v894 = vsel %vm888, %v891, %v893
    %v895 = vsel %vm887, %v874, %v877
    %v896 = vsel %vm890, %v883, 920167782
    %v897 = vsel %vm889, %v880, %v896
    %v898 = vsel %vm888, %v895, %v897
    %v899 = vsel %vm887, %v877, %v880
    %v900 = vsel %vm890, %v886, 1326507024
    %v901 = vsel %vm889, %v883, %v900
    %v902 = vsel %vm888, %v899, %v901
    %v903 = vshll.u32 %v863, 8
    %v904 = vmul.u32.u64.compose %v903, %v902
    %v905 = vextract.low.u32 %v904
    %v906 = vextract.high.u32 %v904
    %v907 = vmul.u32.u64.compose %v903, %v898
    %v908 = vextract.low.u32 %v907
    %v909 = vextract.high.u32 %v907
    %v910 = vmul.u32 %v903, %v894
    %v911 = vadd.s32 %v906, %v908
    %vm912 = vc.u32 %v906, %v908
    %v913 = vadd.s32 %v909, 1
    %v914 = vsel %vm912, %v913, %v909
    %v915 = vadd.s32 %v910, %v914
    %v916 = vadd.s32 %v915, 536870912
    %v917 = vshrl.u32 %v916, 30
    %v918 = vshll.u32 %v917, 30
    %v919 = vsub.s32 %v915, %v918
    %vm920 = vcmp.lt.s32.totalorder %v919, 0
    %v921 = vsub.s32 0, %v919
    %v922 = vsel %vm920, %v921, %v919
    %v923 = vclz %v922
    %v924 = vsub.s32 %v923, 2
    %vm925 = vcmp.gt.s32.totalorder 0, %v924
    %v926 = vsel %vm925, 0, %v924
    %v927 = vsub.s32 32, %v926
    %v928 = vshll.u32 %v919, %v926
    %v929 = vshrl.u32 %v911, %v927
    %v930 = vor.u32 %v928, %v929
    %v931 = vsub.s32 4294967266, %v926
    %v932 = vadd.s32 %v931, 127
    %v933 = vshll.u32 %v932, 23
    %v934 = vor.u32 4788187, %v933
    %v935 = vand.u32 2147483647, %v934
    %v937 = vcvt.s32.f32 %v930
    %v938 = vmul.f32 %v937, %v935
    %v939 = vxor.u32 %v938, 2147483648
    %v940 = vsel %vm857, %v939, %v938
    %v941 = vsub.s32 4, %v917
    %v942 = vsel %vm857, %v941, %v917
    %v943 = vsel %vm856, %v854, %v940
    %v944 = vsel %vm856, 0, %v942
    %v945 = vcosq.f32.pop %v943
    %v946 = vsinq.f32.pop %v943
    %vm947 = vweird.f32 %v854
    %v948 = vand.u32 %v944, 3
    %vm949 = vcmp.lt.s32.totalorder %v948, 2
    %vm950 = vcmp.eq.s32.totalorder %v948, 0
    %v951 = vxor.u32 %v946, 2147483648
    %v952 = vsel %vm950, %v945, %v951
    %vm953 = vcmp.eq.s32.totalorder %v948, 2
    %v954 = vxor.u32 %v945, 2147483648
    %v955 = vsel %vm953, %v954, %v946
    %v956 = vsel %vm949, %v952, %v955
    %v957 = vsel %vm947, nan, %v956
    %v958 = vand.u32 2147483647, %v854
    %vm959 = vcmp.le.f32.partialorder %v958, 0.7853982
    %vm960 = vcmp.lt.s32.totalorder %v854, 0
    %v961 = vand.u32 %v854, 2139095040
    %v962 = vshrl.u32 %v961, 23
    %v963 = vsub.s32 %v962, 127
    %v964 = vand.u32 2147483647, %v854
    %v965 = vand.u32 %v964, 8388607
    %v966 = vor.u32 %v965, 8388608
    %v967 = vsub.s32 0, %v966
    %v968 = vadd.s32 %v963, 1
    %vm969 = vcmp.gt.s32.totalorder %v968, 0
    %v970 = vsel %vm969, %v968, 0
    %v971 = vshrl.u32 %v970, 5
    %v972 = vand.u32 %v970, 31
    %v973 = vsub.s32 32, %v972
    %v974 = vshrl.u32 683565275, %v973
    %v975 = vshll.u32 683565275, %v972
    %v976 = vshrl.u32 2475754826, %v973
    %v977 = vor.u32 %v975, %v976
    %v978 = vshll.u32 2475754826, %v972
    %v979 = vshrl.u32 2131351028, %v973
    %v980 = vor.u32 %v978, %v979
    %v981 = vshll.u32 2131351028, %v972
    %v982 = vshrl.u32 2102212464, %v973
    %v983 = vor.u32 %v981, %v982
    %v984 = vshll.u32 2102212464, %v972
    %v985 = vshrl.u32 920167782, %v973
    %v986 = vor.u32 %v984, %v985
    %v987 = vshll.u32 920167782, %v972
    %v988 = vshrl.u32 1326507024, %v973
    %v989 = vor.u32 %v987, %v988
    %vm990 = vcmp.lt.s32.totalorder %v971, 1
    %vm991 = vcmp.lt.s32.totalorder %v971, 2
    %vm992 = vcmp.lt.s32.totalorder %v971, 3
    %vm993 = vcmp.lt.s32.totalorder %v971, 4
    %v994 = vsel %vm990, %v974, %v977
    %v995 = vsel %vm993, %v983, 2102212464
    %v996 = vsel %vm992, %v980, %v995
    %v997 = vsel %vm991, %v994, %v996
    %v998 = vsel %vm990, %v977, %v980
    %v999 = vsel %vm993, %v986, 920167782
    %v1000 = vsel %vm992, %v983, %v999
    %v1001 = vsel %vm991, %v998, %v1000
    %v1002 = vsel %vm990, %v980, %v983
    %v1003 = vsel %vm993, %v989, 1326507024
    %v1004 = vsel %vm992, %v986, %v1003
    %v1005 = vsel %vm991, %v1002, %v1004
    %v1006 = vshll.u32 %v966, 8
    %v1007 = vmul.u32.u64.compose %v1006, %v1005
    %v1008 = vextract.low.u32 %v1007
    %v1009 = vextract.high.u32 %v1007
    %v1010 = vmul.u32.u64.compose %v1006, %v1001
    %v1011 = vextract.low.u32 %v1010
    %v1012 = vextract.high.u32 %v1010
    %v1013 = vmul.u32 %v1006, %v997
    %v1014 = vadd.s32 %v1009, %v1011
    %vm1015 = vc.u32 %v1009, %v1011
    %v1016 = vadd.s32 %v1012, 1
    %v1017 = vsel %vm1015, %v1016, %v1012
    %v1018 = vadd.s32 %v1013, %v1017
    %v1019 = vadd.s32 %v1018, 536870912
    %v1020 = vshrl.u32 %v1019, 30
    %v1021 = vshll.u32 %v1020, 30
    %v1022 = vsub.s32 %v1018, %v1021
    %vm1023 = vcmp.lt.s32.totalorder %v1022, 0
    %v1024 = vsub.s32 0, %v1022
    %v1025 = vsel %vm1023, %v1024, %v1022
    %v1026 = vclz %v1025
    %v1027 = vsub.s32 %v1026, 2
    %vm1028 = vcmp.gt.s32.totalorder 0, %v1027
    %v1029 = vsel %vm1028, 0, %v1027
    %v1030 = vsub.s32 32, %v1029
    %v1031 = vshll.u32 %v1022, %v1029
    %v1032 = vshrl.u32 %v1014, %v1030
    %v1033 = vor.u32 %v1031, %v1032
    %v1034 = vsub.s32 4294967266, %v1029
    %v1035 = vadd.s32 %v1034, 127
    %v1036 = vshll.u32 %v1035, 23
    %v1037 = vor.u32 4788187, %v1036
    %v1038 = vand.u32 2147483647, %v1037
    %v1040 = vcvt.s32.f32 %v1033
    %v1041 = vmul.f32 %v1040, %v1038
    %v1042 = vxor.u32 %v1041, 2147483648
    %v1043 = vsel %vm960, %v1042, %v1041
    %v1044 = vsub.s32 4, %v1020
    %v1045 = vsel %vm960, %v1044, %v1020
    %v1046 = vsel %vm959, %v854, %v1043
    %v1047 = vsel %vm959, 0, %v1045
    %v1048 = vcosq.f32.pop %v1046
    %v1049 = vsinq.f32.pop %v1046
    %vm1050 = vweird.f32 %v854
    %v1051 = vadd.s32 %v1047, 3
    %v1052 = vand.u32 %v1051, 3
    %vm1053 = vcmp.lt.s32.totalorder %v1052, 2
    %vm1054 = vcmp.eq.s32.totalorder %v1052, 0
    %v1055 = vxor.u32 %v1049, 2147483648
    %v1056 = vsel %vm1054, %v1048, %v1055
    %vm1057 = vcmp.eq.s32.totalorder %v1052, 2
    %v1058 = vxor.u32 %v1048, 2147483648
    %v1059 = vsel %vm1057, %v1058, %v1049
    %v1060 = vsel %vm1053, %v1056, %v1059
    %v1061 = vsel %vm1050, nan, %v1060
    %1063 = vrot.lane.b32.xlu0 %v1061, 32
    %v1064 = vpop.permute.xlu0 %1063
    %v1066 = vsel %vm253, %v957, %v1064
    %s1067 = scalar_lea.vmem %s1, 128
    %v1068 = vld [vmem:[%s1067] sm:$0xff]
    %v1069 = vld [vmem:[%s1067 + $0x8] sm:$0xff]
    %v1070 = vld [vmem:[%s1067 + $0x10] sm:$0xff]
    %v1071 = vld [vmem:[%s1067 + $0x18] sm:$0xff]
    %v1072 = vld [vmem:[%s1067 + $0x20] sm:$0xff]
    %v1073 = vld [vmem:[%s1067 + $0x28] sm:$0xff]
    %v1074 = vld [vmem:[%s1067 + $0x30] sm:$0xff]
    %v1075 = vld [vmem:[%s1067 + $0x38] sm:$0xff]
    %s1076 = scalar_lea.vmem %s2, 8
    %v1077 = vld [vmem:[%s1076] sm:$0xf]
    %v1079 = vsel %vm264, %v1066, 0
    %1081 = vmatprep.subr.mxu0 0.0
    %1082 = vmatpush1.msra.mxu0 %v1068
    %1083 = vmatprep.subr.mxu0 0.0
    %1084 = vmatpush1.msra.mxu0 %v1069
    %1085 = vmatprep.subr.mxu0 0.0
    %1086 = vmatpush1.msra.mxu0 %v1070
    %1087 = vmatprep.subr.mxu0 0.0
    %1088 = vmatpush1.msra.mxu0 %v1071
    %1089 = vmatprep.subr.mxu0 0.0
    %1090 = vmatpush1.msra.mxu0 %v1072
    %1091 = vmatprep.subr.mxu0 0.0
    %1092 = vmatpush1.msra.mxu0 %v1073
    %1093 = vmatprep.subr.mxu0 0.0
    %1094 = vmatpush1.msra.mxu0 %v1074
    %1095 = vmatprep.subr.mxu0 0.0
    %1096 = vmatpush1.msra.mxu0 %v1075
    %1097 = vmatprep.subr.mxu0 0.0
    %1098 = vmatpush1.msra.mxu0 0.0
    %1099 = vmatprep.subr.mxu0 0.0
    %1100 = vmatpush1.msra.mxu0 0.0
    %1101 = vmatprep.subr.mxu0 0.0
    %1102 = vmatpush1.msra.mxu0 0.0
    %1103 = vmatprep.subr.mxu0 0.0
    %1104 = vmatpush1.msra.mxu0 0.0
    %1105 = vmatprep.subr.mxu0 0.0
    %1106 = vmatpush1.msra.mxu0 0.0
    %1107 = vmatprep.subr.mxu0 0.0
    %1108 = vmatpush1.msra.mxu0 0.0
    %1109 = vmatprep.subr.mxu0 0.0
    %1110 = vmatpush1.msra.mxu0 0.0
    %1111 = vmatprep.subr.mxu0 0.0
    %1112 = vmatpush1.msra.mxu0 0.0
    %1113 = vmatprep.subr.mxu0 0.0
    %1114 = vmatpush1.msra.mxu0 0.0
    %1115 = vmatprep.subr.mxu0 0.0
    %1116 = vmatpush1.msra.mxu0 0.0
    %1117 = vmatprep.subr.mxu0 0.0
    %1118 = vmatpush1.msra.mxu0 0.0
    %1119 = vmatprep.subr.mxu0 0.0
    %1120 = vmatpush1.msra.mxu0 0.0
    %1121 = vmatprep.subr.mxu0 0.0
    %1122 = vmatpush1.msra.mxu0 0.0
    %1123 = vmatprep.subr.mxu0 0.0
    %1124 = vmatpush1.msra.mxu0 0.0
    %1125 = vmatprep.subr.mxu0 0.0
    %1126 = vmatpush1.msra.mxu0 0.0
    %1127 = vmatprep.subr.mxu0 0.0
    %1128 = vmatpush1.msra.mxu0 0.0
    %1129 = vmatprep.subr.mxu0 0.0
    %1130 = vmatpush1.msra.mxu0 0.0
    %1131 = vmatprep.subr.mxu0 0.0
    %1132 = vmatpush1.msra.mxu0 0.0
    %1133 = vmatprep.subr.mxu0 0.0
    %1134 = vmatpush1.msra.mxu0 0.0
    %1135 = vmatprep.subr.mxu0 0.0
    %1136 = vmatpush1.msra.mxu0 0.0
    %1137 = vmatprep.subr.mxu0 0.0
    %1138 = vmatpush1.msra.mxu0 0.0
    %1139 = vmatprep.subr.mxu0 0.0
    %1140 = vmatpush1.msra.mxu0 0.0
    %1141 = vmatprep.subr.mxu0 0.0
    %1142 = vmatpush1.msra.mxu0 0.0
    %1143 = vmatprep.subr.mxu0 0.0
    %1144 = vmatpush1.msra.mxu0 0.0
    %1145 = vmatprep.mubr.f32.mxu0 0.0
    %1146 = vmatmul.mubr.f32.gmra.mrb[0].mxu0 %v1079
    %v1147 = vpop.f32.mrb[0].mxu0
    %v1148 = vadd.f32 %v1077, %v1147
    %v1149 = vpop.f32.mrb[0].mxu0
    %1150 = vdwg.mxu0
    %v1151 = vmax.f32 %v1148, 0.0
    %s1152 = scalar_lea.vmem %s3, 128
    %v1153 = vld [vmem:[%s1152] sm:$0xff]
    %v1154 = vld [vmem:[%s1152 + $0x8] sm:$0xff]
    %v1155 = vld [vmem:[%s1152 + $0x10] sm:$0xff]
    %v1156 = vld [vmem:[%s1152 + $0x18] sm:$0xff]
    %v1157 = vld [vmem:[%s1152 + $0x20] sm:$0xff]
    %v1158 = vld [vmem:[%s1152 + $0x28] sm:$0xff]
    %v1159 = vld [vmem:[%s1152 + $0x30] sm:$0xff]
    %v1160 = vld [vmem:[%s1152 + $0x38] sm:$0xff]
    %s1161 = scalar_lea.vmem %s4, 2
    %v1162 = vld [vmem:[%s1161] sm:$0x1]
    %v1164 = vlaneseq
    %v1165 = vshrl.u32 %v1164, 7
    %v1166 = vsub.s32 0, %v1165
    %v1167 = vrot.slane %v1162, %v1166
    %v1170 = vsel %vm264, %v1151, 0
    %1172 = vmatprep.subr.mxu0 0.0
    %1173 = vmatpush1.msra.mxu0 %v1153
    %1174 = vmatprep.subr.mxu0 0.0
    %1175 = vmatpush1.msra.mxu0 %v1154
    %1176 = vmatprep.subr.mxu0 0.0
    %1177 = vmatpush1.msra.mxu0 %v1155
    %1178 = vmatprep.subr.mxu0 0.0
    %1179 = vmatpush1.msra.mxu0 %v1156
    %1180 = vmatprep.subr.mxu0 0.0
    %1181 = vmatpush1.msra.mxu0 %v1157
    %1182 = vmatprep.subr.mxu0 0.0
    %1183 = vmatpush1.msra.mxu0 %v1158
    %1184 = vmatprep.subr.mxu0 0.0
    %1185 = vmatpush1.msra.mxu0 %v1159
    %1186 = vmatprep.subr.mxu0 0.0
    %1187 = vmatpush1.msra.mxu0 %v1160
    %1188 = vmatprep.subr.mxu0 0.0
    %1189 = vmatpush1.msra.mxu0 0.0
    %1190 = vmatprep.subr.mxu0 0.0
    %1191 = vmatpush1.msra.mxu0 0.0
    %1192 = vmatprep.subr.mxu0 0.0
    %1193 = vmatpush1.msra.mxu0 0.0
    %1194 = vmatprep.subr.mxu0 0.0
    %1195 = vmatpush1.msra.mxu0 0.0
    %1196 = vmatprep.subr.mxu0 0.0
    %1197 = vmatpush1.msra.mxu0 0.0
    %1198 = vmatprep.subr.mxu0 0.0
    %1199 = vmatpush1.msra.mxu0 0.0
    %1200 = vmatprep.subr.mxu0 0.0
    %1201 = vmatpush1.msra.mxu0 0.0
    %1202 = vmatprep.subr.mxu0 0.0
    %1203 = vmatpush1.msra.mxu0 0.0
    %1204 = vmatprep.subr.mxu0 0.0
    %1205 = vmatpush1.msra.mxu0 0.0
    %1206 = vmatprep.subr.mxu0 0.0
    %1207 = vmatpush1.msra.mxu0 0.0
    %1208 = vmatprep.subr.mxu0 0.0
    %1209 = vmatpush1.msra.mxu0 0.0
    %1210 = vmatprep.subr.mxu0 0.0
    %1211 = vmatpush1.msra.mxu0 0.0
    %1212 = vmatprep.subr.mxu0 0.0
    %1213 = vmatpush1.msra.mxu0 0.0
    %1214 = vmatprep.subr.mxu0 0.0
    %1215 = vmatpush1.msra.mxu0 0.0
    %1216 = vmatprep.subr.mxu0 0.0
    %1217 = vmatpush1.msra.mxu0 0.0
    %1218 = vmatprep.subr.mxu0 0.0
    %1219 = vmatpush1.msra.mxu0 0.0
    %1220 = vmatprep.subr.mxu0 0.0
    %1221 = vmatpush1.msra.mxu0 0.0
    %1222 = vmatprep.subr.mxu0 0.0
    %1223 = vmatpush1.msra.mxu0 0.0
    %1224 = vmatprep.subr.mxu0 0.0
    %1225 = vmatpush1.msra.mxu0 0.0
    %1226 = vmatprep.subr.mxu0 0.0
    %1227 = vmatpush1.msra.mxu0 0.0
    %1228 = vmatprep.subr.mxu0 0.0
    %1229 = vmatpush1.msra.mxu0 0.0
    %1230 = vmatprep.subr.mxu0 0.0
    %1231 = vmatpush1.msra.mxu0 0.0
    %1232 = vmatprep.subr.mxu0 0.0
    %1233 = vmatpush1.msra.mxu0 0.0
    %1234 = vmatprep.subr.mxu0 0.0
    %1235 = vmatpush1.msra.mxu0 0.0
    %1236 = vmatprep.mubr.f32.mxu0 0.0
    %1237 = vmatmul.mubr.f32.gmra.mrb[0].mxu0 %v1170
    %v1238 = vpop.f32.mrb[0].mxu0
    %v1239 = vadd.f32 %v1167, %v1238
    %v1240 = vpop.f32.mrb[0].mxu0
    %1241 = vdwg.mxu0
    %s1242 = scalar_lea.vmem %s5, 2
    %v1243 = vld [vmem:[%s1242] sm:$0x1]
    %v1245 = vlaneseq
    %v1246 = vshrl.u32 %v1245, 7
    %v1247 = vsub.s32 0, %v1246
    %v1248 = vrot.slane %v1243, %v1247
    %v1250 = vmul.f32 %v1151, %v1248
    %v1251 = vsel %vm435, %v1250, 0.0
    %1252 = vadd.xlane.f32.xlu0 %v1251
    %v1253 = vpop.xlane.xlu0 %1252
    %s1254 = sld [smem:[#allocation2 + $0x2]]
    %v1255 = vstv %s1254
    %v1256 = vadd.f32 %v1253, %v1255
    %s1257 = scalar_lea.vmem %s7, 8
    %1258 = vst.msk [vmem:[%s1257] sm:$0xf] %vm435, %v1066
    %s1259 = scalar_lea.vmem %s8, 8
    %1260 = vst.msk [vmem:[%s1259] sm:$0xf] %vm443, %v1239
    %v1261 = vmul.f32 %v1256, %v1239
    %v1262 = vsub.f32 %v854, %v1261
    %v1263 = vand.u32 2147483647, %v1262
    %vm1264 = vcmp.le.f32.partialorder %v1263, 0.7853982
    %vm1265 = vcmp.lt.s32.totalorder %v1262, 0
    %v1266 = vand.u32 %v1262, 2139095040
    %v1267 = vshrl.u32 %v1266, 23
    %v1268 = vsub.s32 %v1267, 127
    %v1269 = vand.u32 2147483647, %v1262
    %v1270 = vand.u32 %v1269, 8388607
    %v1271 = vor.u32 %v1270, 8388608
    %v1272 = vsub.s32 0, %v1271
    %v1273 = vadd.s32 %v1268, 1
    %vm1274 = vcmp.gt.s32.totalorder %v1273, 0
    %v1275 = vsel %vm1274, %v1273, 0
    %v1276 = vshrl.u32 %v1275, 5
    %v1277 = vand.u32 %v1275, 31
    %v1278 = vsub.s32 32, %v1277
    %v1279 = vshrl.u32 683565275, %v1278
    %v1280 = vshll.u32 683565275, %v1277
    %v1281 = vshrl.u32 2475754826, %v1278
    %v1282 = vor.u32 %v1280, %v1281
    %v1283 = vshll.u32 2475754826, %v1277
    %v1284 = vshrl.u32 2131351028, %v1278
    %v1285 = vor.u32 %v1283, %v1284
    %v1286 = vshll.u32 2131351028, %v1277
    %v1287 = vshrl.u32 2102212464, %v1278
    %v1288 = vor.u32 %v1286, %v1287
    %v1289 = vshll.u32 2102212464, %v1277
    %v1290 = vshrl.u32 920167782, %v1278
    %v1291 = vor.u32 %v1289, %v1290
    %v1292 = vshll.u32 920167782, %v1277
    %v1293 = vshrl.u32 1326507024, %v1278
    %v1294 = vor.u32 %v1292, %v1293
    %vm1295 = vcmp.lt.s32.totalorder %v1276, 1
    %vm1296 = vcmp.lt.s32.totalorder %v1276, 2
    %vm1297 = vcmp.lt.s32.totalorder %v1276, 3
    %vm1298 = vcmp.lt.s32.totalorder %v1276, 4
    %v1299 = vsel %vm1295, %v1279, %v1282
    %v1300 = vsel %vm1298, %v1288, 2102212464
    %v1301 = vsel %vm1297, %v1285, %v1300
    %v1302 = vsel %vm1296, %v1299, %v1301
    %v1303 = vsel %vm1295, %v1282, %v1285
    %v1304 = vsel %vm1298, %v1291, 920167782
    %v1305 = vsel %vm1297, %v1288, %v1304
    %v1306 = vsel %vm1296, %v1303, %v1305
    %v1307 = vsel %vm1295, %v1285, %v1288
    %v1308 = vsel %vm1298, %v1294, 1326507024
    %v1309 = vsel %vm1297, %v1291, %v1308
    %v1310 = vsel %vm1296, %v1307, %v1309
    %v1311 = vshll.u32 %v1271, 8
    %v1312 = vmul.u32.u64.compose %v1311, %v1310
    %v1313 = vextract.low.u32 %v1312
    %v1314 = vextract.high.u32 %v1312
    %v1315 = vmul.u32.u64.compose %v1311, %v1306
    %v1316 = vextract.low.u32 %v1315
    %v1317 = vextract.high.u32 %v1315
    %v1318 = vmul.u32 %v1311, %v1302
    %v1319 = vadd.s32 %v1314, %v1316
    %vm1320 = vc.u32 %v1314, %v1316
    %v1321 = vadd.s32 %v1317, 1
    %v1322 = vsel %vm1320, %v1321, %v1317
    %v1323 = vadd.s32 %v1318, %v1322
    %v1324 = vadd.s32 %v1323, 536870912
    %v1325 = vshrl.u32 %v1324, 30
    %v1326 = vshll.u32 %v1325, 30
    %v1327 = vsub.s32 %v1323, %v1326
    %vm1328 = vcmp.lt.s32.totalorder %v1327, 0
    %v1329 = vsub.s32 0, %v1327
    %v1330 = vsel %vm1328, %v1329, %v1327
    %v1331 = vclz %v1330
    %v1332 = vsub.s32 %v1331, 2
    %vm1333 = vcmp.gt.s32.totalorder 0, %v1332
    %v1334 = vsel %vm1333, 0, %v1332
    %v1335 = vsub.s32 32, %v1334
    %v1336 = vshll.u32 %v1327, %v1334
    %v1337 = vshrl.u32 %v1319, %v1335
    %v1338 = vor.u32 %v1336, %v1337
    %v1339 = vsub.s32 4294967266, %v1334
    %v1340 = vadd.s32 %v1339, 127
    %v1341 = vshll.u32 %v1340, 23
    %v1342 = vor.u32 4788187, %v1341
    %v1343 = vand.u32 2147483647, %v1342
    %v1345 = vcvt.s32.f32 %v1338
    %v1346 = vmul.f32 %v1345, %v1343
    %v1347 = vxor.u32 %v1346, 2147483648
    %v1348 = vsel %vm1265, %v1347, %v1346
    %v1349 = vsub.s32 4, %v1325
    %v1350 = vsel %vm1265, %v1349, %v1325
    %v1351 = vsel %vm1264, %v1262, %v1348
    %v1352 = vsel %vm1264, 0, %v1350
    %v1353 = vcosq.f32.pop %v1351
    %v1354 = vsinq.f32.pop %v1351
    %vm1355 = vweird.f32 %v1262
    %v1356 = vand.u32 %v1352, 3
    %vm1357 = vcmp.lt.s32.totalorder %v1356, 2
    %vm1358 = vcmp.eq.s32.totalorder %v1356, 0
    %v1359 = vxor.u32 %v1354, 2147483648
    %v1360 = vsel %vm1358, %v1353, %v1359
    %vm1361 = vcmp.eq.s32.totalorder %v1356, 2
    %v1362 = vxor.u32 %v1353, 2147483648
    %v1363 = vsel %vm1361, %v1362, %v1354
    %v1364 = vsel %vm1357, %v1360, %v1363
    %v1365 = vsel %vm1355, nan, %v1364
    %v1366 = vand.u32 2147483647, %v1262
    %vm1367 = vcmp.le.f32.partialorder %v1366, 0.7853982
    %vm1368 = vcmp.lt.s32.totalorder %v1262, 0
    %v1369 = vand.u32 %v1262, 2139095040
    %v1370 = vshrl.u32 %v1369, 23
    %v1371 = vsub.s32 %v1370, 127
    %v1372 = vand.u32 2147483647, %v1262
    %v1373 = vand.u32 %v1372, 8388607
    %v1374 = vor.u32 %v1373, 8388608
    %v1375 = vsub.s32 0, %v1374
    %v1376 = vadd.s32 %v1371, 1
    %vm1377 = vcmp.gt.s32.totalorder %v1376, 0
    %v1378 = vsel %vm1377, %v1376, 0
    %v1379 = vshrl.u32 %v1378, 5
    %v1380 = vand.u32 %v1378, 31
    %v1381 = vsub.s32 32, %v1380
    %v1382 = vshrl.u32 683565275, %v1381
    %v1383 = vshll.u32 683565275, %v1380
    %v1384 = vshrl.u32 2475754826, %v1381
    %v1385 = vor.u32 %v1383, %v1384
    %v1386 = vshll.u32 2475754826, %v1380
    %v1387 = vshrl.u32 2131351028, %v1381
    %v1388 = vor.u32 %v1386, %v1387
    %v1389 = vshll.u32 2131351028, %v1380
    %v1390 = vshrl.u32 2102212464, %v1381
    %v1391 = vor.u32 %v1389, %v1390
    %v1392 = vshll.u32 2102212464, %v1380
    %v1393 = vshrl.u32 920167782, %v1381
    %v1394 = vor.u32 %v1392, %v1393
    %v1395 = vshll.u32 920167782, %v1380
    %v1396 = vshrl.u32 1326507024, %v1381
    %v1397 = vor.u32 %v1395, %v1396
    %vm1398 = vcmp.lt.s32.totalorder %v1379, 1
    %vm1399 = vcmp.lt.s32.totalorder %v1379, 2
    %vm1400 = vcmp.lt.s32.totalorder %v1379, 3
    %vm1401 = vcmp.lt.s32.totalorder %v1379, 4
    %v1402 = vsel %vm1398, %v1382, %v1385
    %v1403 = vsel %vm1401, %v1391, 2102212464
    %v1404 = vsel %vm1400, %v1388, %v1403
    %v1405 = vsel %vm1399, %v1402, %v1404
    %v1406 = vsel %vm1398, %v1385, %v1388
    %v1407 = vsel %vm1401, %v1394, 920167782
    %v1408 = vsel %vm1400, %v1391, %v1407
    %v1409 = vsel %vm1399, %v1406, %v1408
    %v1410 = vsel %vm1398, %v1388, %v1391
    %v1411 = vsel %vm1401, %v1397, 1326507024
    %v1412 = vsel %vm1400, %v1394, %v1411
    %v1413 = vsel %vm1399, %v1410, %v1412
    %v1414 = vshll.u32 %v1374, 8
    %v1415 = vmul.u32.u64.compose %v1414, %v1413
    %v1416 = vextract.low.u32 %v1415
    %v1417 = vextract.high.u32 %v1415
    %v1418 = vmul.u32.u64.compose %v1414, %v1409
    %v1419 = vextract.low.u32 %v1418
    %v1420 = vextract.high.u32 %v1418
    %v1421 = vmul.u32 %v1414, %v1405
    %v1422 = vadd.s32 %v1417, %v1419
    %vm1423 = vc.u32 %v1417, %v1419
    %v1424 = vadd.s32 %v1420, 1
    %v1425 = vsel %vm1423, %v1424, %v1420
    %v1426 = vadd.s32 %v1421, %v1425
    %v1427 = vadd.s32 %v1426, 536870912
    %v1428 = vshrl.u32 %v1427, 30
    %v1429 = vshll.u32 %v1428, 30
    %v1430 = vsub.s32 %v1426, %v1429
    %vm1431 = vcmp.lt.s32.totalorder %v1430, 0
    %v1432 = vsub.s32 0, %v1430
    %v1433 = vsel %vm1431, %v1432, %v1430
    %v1434 = vclz %v1433
    %v1435 = vsub.s32 %v1434, 2
    %vm1436 = vcmp.gt.s32.totalorder 0, %v1435
    %v1437 = vsel %vm1436, 0, %v1435
    %v1438 = vsub.s32 32, %v1437
    %v1439 = vshll.u32 %v1430, %v1437
    %v1440 = vshrl.u32 %v1422, %v1438
    %v1441 = vor.u32 %v1439, %v1440
    %v1442 = vsub.s32 4294967266, %v1437
    %v1443 = vadd.s32 %v1442, 127
    %v1444 = vshll.u32 %v1443, 23
    %v1445 = vor.u32 4788187, %v1444
    %v1446 = vand.u32 2147483647, %v1445
    %v1448 = vcvt.s32.f32 %v1441
    %v1449 = vmul.f32 %v1448, %v1446
    %v1450 = vxor.u32 %v1449, 2147483648
    %v1451 = vsel %vm1368, %v1450, %v1449
    %v1452 = vsub.s32 4, %v1428
    %v1453 = vsel %vm1368, %v1452, %v1428
    %v1454 = vsel %vm1367, %v1262, %v1451
    %v1455 = vsel %vm1367, 0, %v1453
    %v1456 = vcosq.f32.pop %v1454
    %v1457 = vsinq.f32.pop %v1454
    %vm1458 = vweird.f32 %v1262
    %v1459 = vadd.s32 %v1455, 3
    %v1460 = vand.u32 %v1459, 3
    %vm1461 = vcmp.lt.s32.totalorder %v1460, 2
    %vm1462 = vcmp.eq.s32.totalorder %v1460, 0
    %v1463 = vxor.u32 %v1457, 2147483648
    %v1464 = vsel %vm1462, %v1456, %v1463
    %vm1465 = vcmp.eq.s32.totalorder %v1460, 2
    %v1466 = vxor.u32 %v1456, 2147483648
    %v1467 = vsel %vm1465, %v1466, %v1457
    %v1468 = vsel %vm1461, %v1464, %v1467
    %v1469 = vsel %vm1458, nan, %v1468
    %1471 = vrot.lane.b32.xlu0 %v1469, 32
    %v1472 = vpop.permute.xlu0 %1471
    %v1474 = vsel %vm253, %v1365, %v1472
    %s1475 = scalar_lea.vmem %s1, 192
    %v1476 = vld [vmem:[%s1475] sm:$0xff]
    %v1477 = vld [vmem:[%s1475 + $0x8] sm:$0xff]
    %v1478 = vld [vmem:[%s1475 + $0x10] sm:$0xff]
    %v1479 = vld [vmem:[%s1475 + $0x18] sm:$0xff]
    %v1480 = vld [vmem:[%s1475 + $0x20] sm:$0xff]
    %v1481 = vld [vmem:[%s1475 + $0x28] sm:$0xff]
    %v1482 = vld [vmem:[%s1475 + $0x30] sm:$0xff]
    %v1483 = vld [vmem:[%s1475 + $0x38] sm:$0xff]
    %s1484 = scalar_lea.vmem %s2, 12
    %v1485 = vld [vmem:[%s1484] sm:$0xf]
    %v1487 = vsel %vm264, %v1474, 0
    %1489 = vmatprep.subr.mxu0 0.0
    %1490 = vmatpush1.msra.mxu0 %v1476
    %1491 = vmatprep.subr.mxu0 0.0
    %1492 = vmatpush1.msra.mxu0 %v1477
    %1493 = vmatprep.subr.mxu0 0.0
    %1494 = vmatpush1.msra.mxu0 %v1478
    %1495 = vmatprep.subr.mxu0 0.0
    %1496 = vmatpush1.msra.mxu0 %v1479
    %1497 = vmatprep.subr.mxu0 0.0
    %1498 = vmatpush1.msra.mxu0 %v1480
    %1499 = vmatprep.subr.mxu0 0.0
    %1500 = vmatpush1.msra.mxu0 %v1481
    %1501 = vmatprep.subr.mxu0 0.0
    %1502 = vmatpush1.msra.mxu0 %v1482
    %1503 = vmatprep.subr.mxu0 0.0
    %1504 = vmatpush1.msra.mxu0 %v1483
    %1505 = vmatprep.subr.mxu0 0.0
    %1506 = vmatpush1.msra.mxu0 0.0
    %1507 = vmatprep.subr.mxu0 0.0
    %1508 = vmatpush1.msra.mxu0 0.0
    %1509 = vmatprep.subr.mxu0 0.0
    %1510 = vmatpush1.msra.mxu0 0.0
    %1511 = vmatprep.subr.mxu0 0.0
    %1512 = vmatpush1.msra.mxu0 0.0
    %1513 = vmatprep.subr.mxu0 0.0
    %1514 = vmatpush1.msra.mxu0 0.0
    %1515 = vmatprep.subr.mxu0 0.0
    %1516 = vmatpush1.msra.mxu0 0.0
    %1517 = vmatprep.subr.mxu0 0.0
    %1518 = vmatpush1.msra.mxu0 0.0
    %1519 = vmatprep.subr.mxu0 0.0
    %1520 = vmatpush1.msra.mxu0 0.0
    %1521 = vmatprep.subr.mxu0 0.0
    %1522 = vmatpush1.msra.mxu0 0.0
    %1523 = vmatprep.subr.mxu0 0.0
    %1524 = vmatpush1.msra.mxu0 0.0
    %1525 = vmatprep.subr.mxu0 0.0
    %1526 = vmatpush1.msra.mxu0 0.0
    %1527 = vmatprep.subr.mxu0 0.0
    %1528 = vmatpush1.msra.mxu0 0.0
    %1529 = vmatprep.subr.mxu0 0.0
    %1530 = vmatpush1.msra.mxu0 0.0
    %1531 = vmatprep.subr.mxu0 0.0
    %1532 = vmatpush1.msra.mxu0 0.0
    %1533 = vmatprep.subr.mxu0 0.0
    %1534 = vmatpush1.msra.mxu0 0.0
    %1535 = vmatprep.subr.mxu0 0.0
    %1536 = vmatpush1.msra.mxu0 0.0
    %1537 = vmatprep.subr.mxu0 0.0
    %1538 = vmatpush1.msra.mxu0 0.0
    %1539 = vmatprep.subr.mxu0 0.0
    %1540 = vmatpush1.msra.mxu0 0.0
    %1541 = vmatprep.subr.mxu0 0.0
    %1542 = vmatpush1.msra.mxu0 0.0
    %1543 = vmatprep.subr.mxu0 0.0
    %1544 = vmatpush1.msra.mxu0 0.0
    %1545 = vmatprep.subr.mxu0 0.0
    %1546 = vmatpush1.msra.mxu0 0.0
    %1547 = vmatprep.subr.mxu0 0.0
    %1548 = vmatpush1.msra.mxu0 0.0
    %1549 = vmatprep.subr.mxu0 0.0
    %1550 = vmatpush1.msra.mxu0 0.0
    %1551 = vmatprep.subr.mxu0 0.0
    %1552 = vmatpush1.msra.mxu0 0.0
    %1553 = vmatprep.mubr.f32.mxu0 0.0
    %1554 = vmatmul.mubr.f32.gmra.mrb[0].mxu0 %v1487
    %v1555 = vpop.f32.mrb[0].mxu0
    %v1556 = vadd.f32 %v1485, %v1555
    %v1557 = vpop.f32.mrb[0].mxu0
    %1558 = vdwg.mxu0
    %v1559 = vmax.f32 %v1556, 0.0
    %s1560 = scalar_lea.vmem %s3, 192
    %v1561 = vld [vmem:[%s1560] sm:$0xff]
    %v1562 = vld [vmem:[%s1560 + $0x8] sm:$0xff]
    %v1563 = vld [vmem:[%s1560 + $0x10] sm:$0xff]
    %v1564 = vld [vmem:[%s1560 + $0x18] sm:$0xff]
    %v1565 = vld [vmem:[%s1560 + $0x20] sm:$0xff]
    %v1566 = vld [vmem:[%s1560 + $0x28] sm:$0xff]
    %v1567 = vld [vmem:[%s1560 + $0x30] sm:$0xff]
    %v1568 = vld [vmem:[%s1560 + $0x38] sm:$0xff]
    %s1569 = scalar_lea.vmem %s4, 3
    %v1570 = vld [vmem:[%s1569] sm:$0x1]
    %v1572 = vlaneseq
    %v1573 = vshrl.u32 %v1572, 7
    %v1574 = vsub.s32 0, %v1573
    %v1575 = vrot.slane %v1570, %v1574
    %v1578 = vsel %vm264, %v1559, 0
    %1580 = vmatprep.subr.mxu0 0.0
    %1581 = vmatpush1.msra.mxu0 %v1561
    %1582 = vmatprep.subr.mxu0 0.0
    %1583 = vmatpush1.msra.mxu0 %v1562
    %1584 = vmatprep.subr.mxu0 0.0
    %1585 = vmatpush1.msra.mxu0 %v1563
    %1586 = vmatprep.subr.mxu0 0.0
    %1587 = vmatpush1.msra.mxu0 %v1564
    %1588 = vmatprep.subr.mxu0 0.0
    %1589 = vmatpush1.msra.mxu0 %v1565
    %1590 = vmatprep.subr.mxu0 0.0
    %1591 = vmatpush1.msra.mxu0 %v1566
    %1592 = vmatprep.subr.mxu0 0.0
    %1593 = vmatpush1.msra.mxu0 %v1567
    %1594 = vmatprep.subr.mxu0 0.0
    %1595 = vmatpush1.msra.mxu0 %v1568
    %1596 = vmatprep.subr.mxu0 0.0
    %1597 = vmatpush1.msra.mxu0 0.0
    %1598 = vmatprep.subr.mxu0 0.0
    %1599 = vmatpush1.msra.mxu0 0.0
    %1600 = vmatprep.subr.mxu0 0.0
    %1601 = vmatpush1.msra.mxu0 0.0
    %1602 = vmatprep.subr.mxu0 0.0
    %1603 = vmatpush1.msra.mxu0 0.0
    %1604 = vmatprep.subr.mxu0 0.0
    %1605 = vmatpush1.msra.mxu0 0.0
    %1606 = vmatprep.subr.mxu0 0.0
    %1607 = vmatpush1.msra.mxu0 0.0
    %1608 = vmatprep.subr.mxu0 0.0
    %1609 = vmatpush1.msra.mxu0 0.0
    %1610 = vmatprep.subr.mxu0 0.0
    %1611 = vmatpush1.msra.mxu0 0.0
    %1612 = vmatprep.subr.mxu0 0.0
    %1613 = vmatpush1.msra.mxu0 0.0
    %1614 = vmatprep.subr.mxu0 0.0
    %1615 = vmatpush1.msra.mxu0 0.0
    %1616 = vmatprep.subr.mxu0 0.0
    %1617 = vmatpush1.msra.mxu0 0.0
    %1618 = vmatprep.subr.mxu0 0.0
    %1619 = vmatpush1.msra.mxu0 0.0
    %1620 = vmatprep.subr.mxu0 0.0
    %1621 = vmatpush1.msra.mxu0 0.0
    %1622 = vmatprep.subr.mxu0 0.0
    %1623 = vmatpush1.msra.mxu0 0.0
    %1624 = vmatprep.subr.mxu0 0.0
    %1625 = vmatpush1.msra.mxu0 0.0
    %1626 = vmatprep.subr.mxu0 0.0
    %1627 = vmatpush1.msra.mxu0 0.0
    %1628 = vmatprep.subr.mxu0 0.0
    %1629 = vmatpush1.msra.mxu0 0.0
    %1630 = vmatprep.subr.mxu0 0.0
    %1631 = vmatpush1.msra.mxu0 0.0
    %1632 = vmatprep.subr.mxu0 0.0
    %1633 = vmatpush1.msra.mxu0 0.0
    %1634 = vmatprep.subr.mxu0 0.0
    %1635 = vmatpush1.msra.mxu0 0.0
    %1636 = vmatprep.subr.mxu0 0.0
    %1637 = vmatpush1.msra.mxu0 0.0
    %1638 = vmatprep.subr.mxu0 0.0
    %1639 = vmatpush1.msra.mxu0 0.0
    %1640 = vmatprep.subr.mxu0 0.0
    %1641 = vmatpush1.msra.mxu0 0.0
    %1642 = vmatprep.subr.mxu0 0.0
    %1643 = vmatpush1.msra.mxu0 0.0
    %1644 = vmatprep.mubr.f32.mxu0 0.0
    %1645 = vmatmul.mubr.f32.gmra.mrb[0].mxu0 %v1578
    %v1646 = vpop.f32.mrb[0].mxu0
    %v1647 = vadd.f32 %v1575, %v1646
    %v1648 = vpop.f32.mrb[0].mxu0
    %1649 = vdwg.mxu0
    %s1650 = scalar_lea.vmem %s5, 3
    %v1651 = vld [vmem:[%s1650] sm:$0x1]
    %v1653 = vlaneseq
    %v1654 = vshrl.u32 %v1653, 7
    %v1655 = vsub.s32 0, %v1654
    %v1656 = vrot.slane %v1651, %v1655
    %v1658 = vmul.f32 %v1559, %v1656
    %v1659 = vsel %vm435, %v1658, 0.0
    %1660 = vadd.xlane.f32.xlu0 %v1659
    %v1661 = vpop.xlane.xlu0 %1660
    %s1662 = sld [smem:[#allocation2 + $0x3]]
    %v1663 = vstv %s1662
    %v1664 = vadd.f32 %v1661, %v1663
    %s1665 = scalar_lea.vmem %s7, 12
    %1666 = vst.msk [vmem:[%s1665] sm:$0xf] %vm435, %v1474
    %s1667 = scalar_lea.vmem %s8, 12
    %1668 = vst.msk [vmem:[%s1667] sm:$0xf] %vm443, %v1647
    %v1669 = vmul.f32 %v1664, %v1647
    %v1670 = vsub.f32 %v1262, %v1669
    %v1671 = vand.u32 2147483647, %v1670
    %vm1672 = vcmp.le.f32.partialorder %v1671, 0.7853982
    %vm1673 = vcmp.lt.s32.totalorder %v1670, 0
    %v1674 = vand.u32 %v1670, 2139095040
    %v1675 = vshrl.u32 %v1674, 23
    %v1676 = vsub.s32 %v1675, 127
    %v1677 = vand.u32 2147483647, %v1670
    %v1678 = vand.u32 %v1677, 8388607
    %v1679 = vor.u32 %v1678, 8388608
    %v1680 = vsub.s32 0, %v1679
    %v1681 = vadd.s32 %v1676, 1
    %vm1682 = vcmp.gt.s32.totalorder %v1681, 0
    %v1683 = vsel %vm1682, %v1681, 0
    %v1684 = vshrl.u32 %v1683, 5
    %v1685 = vand.u32 %v1683, 31
    %v1686 = vsub.s32 32, %v1685
    %v1687 = vshrl.u32 683565275, %v1686
    %v1688 = vshll.u32 683565275, %v1685
    %v1689 = vshrl.u32 2475754826, %v1686
    %v1690 = vor.u32 %v1688, %v1689
    %v1691 = vshll.u32 2475754826, %v1685
    %v1692 = vshrl.u32 2131351028, %v1686
    %v1693 = vor.u32 %v1691, %v1692
    %v1694 = vshll.u32 2131351028, %v1685
    %v1695 = vshrl.u32 2102212464, %v1686
    %v1696 = vor.u32 %v1694, %v1695
    %v1697 = vshll.u32 2102212464, %v1685
    %v1698 = vshrl.u32 920167782, %v1686
    %v1699 = vor.u32 %v1697, %v1698
    %v1700 = vshll.u32 920167782, %v1685
    %v1701 = vshrl.u32 1326507024, %v1686
    %v1702 = vor.u32 %v1700, %v1701
    %vm1703 = vcmp.lt.s32.totalorder %v1684, 1
    %vm1704 = vcmp.lt.s32.totalorder %v1684, 2
    %vm1705 = vcmp.lt.s32.totalorder %v1684, 3
    %vm1706 = vcmp.lt.s32.totalorder %v1684, 4
    %v1707 = vsel %vm1703, %v1687, %v1690
    %v1708 = vsel %vm1706, %v1696, 2102212464
    %v1709 = vsel %vm1705, %v1693, %v1708
    %v1710 = vsel %vm1704, %v1707, %v1709
    %v1711 = vsel %vm1703, %v1690, %v1693
    %v1712 = vsel %vm1706, %v1699, 920167782
    %v1713 = vsel %vm1705, %v1696, %v1712
    %v1714 = vsel %vm1704, %v1711, %v1713
    %v1715 = vsel %vm1703, %v1693, %v1696
    %v1716 = vsel %vm1706, %v1702, 1326507024
    %v1717 = vsel %vm1705, %v1699, %v1716
    %v1718 = vsel %vm1704, %v1715, %v1717
    %v1719 = vshll.u32 %v1679, 8
    %v1720 = vmul.u32.u64.compose %v1719, %v1718
    %v1721 = vextract.low.u32 %v1720
    %v1722 = vextract.high.u32 %v1720
    %v1723 = vmul.u32.u64.compose %v1719, %v1714
    %v1724 = vextract.low.u32 %v1723
    %v1725 = vextract.high.u32 %v1723
    %v1726 = vmul.u32 %v1719, %v1710
    %v1727 = vadd.s32 %v1722, %v1724
    %vm1728 = vc.u32 %v1722, %v1724
    %v1729 = vadd.s32 %v1725, 1
    %v1730 = vsel %vm1728, %v1729, %v1725
    %v1731 = vadd.s32 %v1726, %v1730
    %v1732 = vadd.s32 %v1731, 536870912
    %v1733 = vshrl.u32 %v1732, 30
    %v1734 = vshll.u32 %v1733, 30
    %v1735 = vsub.s32 %v1731, %v1734
    %vm1736 = vcmp.lt.s32.totalorder %v1735, 0
    %v1737 = vsub.s32 0, %v1735
    %v1738 = vsel %vm1736, %v1737, %v1735
    %v1739 = vclz %v1738
    %v1740 = vsub.s32 %v1739, 2
    %vm1741 = vcmp.gt.s32.totalorder 0, %v1740
    %v1742 = vsel %vm1741, 0, %v1740
    %v1743 = vsub.s32 32, %v1742
    %v1744 = vshll.u32 %v1735, %v1742
    %v1745 = vshrl.u32 %v1727, %v1743
    %v1746 = vor.u32 %v1744, %v1745
    %v1747 = vsub.s32 4294967266, %v1742
    %v1748 = vadd.s32 %v1747, 127
    %v1749 = vshll.u32 %v1748, 23
    %v1750 = vor.u32 4788187, %v1749
    %v1751 = vand.u32 2147483647, %v1750
    %v1753 = vcvt.s32.f32 %v1746
    %v1754 = vmul.f32 %v1753, %v1751
    %v1755 = vxor.u32 %v1754, 2147483648
    %v1756 = vsel %vm1673, %v1755, %v1754
    %v1757 = vsub.s32 4, %v1733
    %v1758 = vsel %vm1673, %v1757, %v1733
    %v1759 = vsel %vm1672, %v1670, %v1756
    %v1760 = vsel %vm1672, 0, %v1758
    %v1761 = vcosq.f32.pop %v1759
    %v1762 = vsinq.f32.pop %v1759
    %vm1763 = vweird.f32 %v1670
    %v1764 = vand.u32 %v1760, 3
    %vm1765 = vcmp.lt.s32.totalorder %v1764, 2
    %vm1766 = vcmp.eq.s32.totalorder %v1764, 0
    %v1767 = vxor.u32 %v1762, 2147483648
    %v1768 = vsel %vm1766, %v1761, %v1767
    %vm1769 = vcmp.eq.s32.totalorder %v1764, 2
    %v1770 = vxor.u32 %v1761, 2147483648
    %v1771 = vsel %vm1769, %v1770, %v1762
    %v1772 = vsel %vm1765, %v1768, %v1771
    %v1773 = vsel %vm1763, nan, %v1772
    %v1774 = vand.u32 2147483647, %v1670
    %vm1775 = vcmp.le.f32.partialorder %v1774, 0.7853982
    %vm1776 = vcmp.lt.s32.totalorder %v1670, 0
    %v1777 = vand.u32 %v1670, 2139095040
    %v1778 = vshrl.u32 %v1777, 23
    %v1779 = vsub.s32 %v1778, 127
    %v1780 = vand.u32 2147483647, %v1670
    %v1781 = vand.u32 %v1780, 8388607
    %v1782 = vor.u32 %v1781, 8388608
    %v1783 = vsub.s32 0, %v1782
    %v1784 = vadd.s32 %v1779, 1
    %vm1785 = vcmp.gt.s32.totalorder %v1784, 0
    %v1786 = vsel %vm1785, %v1784, 0
    %v1787 = vshrl.u32 %v1786, 5
    %v1788 = vand.u32 %v1786, 31
    %v1789 = vsub.s32 32, %v1788
    %v1790 = vshrl.u32 683565275, %v1789
    %v1791 = vshll.u32 683565275, %v1788
    %v1792 = vshrl.u32 2475754826, %v1789
    %v1793 = vor.u32 %v1791, %v1792
    %v1794 = vshll.u32 2475754826, %v1788
    %v1795 = vshrl.u32 2131351028, %v1789
    %v1796 = vor.u32 %v1794, %v1795
    %v1797 = vshll.u32 2131351028, %v1788
    %v1798 = vshrl.u32 2102212464, %v1789
    %v1799 = vor.u32 %v1797, %v1798
    %v1800 = vshll.u32 2102212464, %v1788
    %v1801 = vshrl.u32 920167782, %v1789
    %v1802 = vor.u32 %v1800, %v1801
    %v1803 = vshll.u32 920167782, %v1788
    %v1804 = vshrl.u32 1326507024, %v1789
    %v1805 = vor.u32 %v1803, %v1804
    %vm1806 = vcmp.lt.s32.totalorder %v1787, 1
    %vm1807 = vcmp.lt.s32.totalorder %v1787, 2
    %vm1808 = vcmp.lt.s32.totalorder %v1787, 3
    %vm1809 = vcmp.lt.s32.totalorder %v1787, 4
    %v1810 = vsel %vm1806, %v1790, %v1793
    %v1811 = vsel %vm1809, %v1799, 2102212464
    %v1812 = vsel %vm1808, %v1796, %v1811
    %v1813 = vsel %vm1807, %v1810, %v1812
    %v1814 = vsel %vm1806, %v1793, %v1796
    %v1815 = vsel %vm1809, %v1802, 920167782
    %v1816 = vsel %vm1808, %v1799, %v1815
    %v1817 = vsel %vm1807, %v1814, %v1816
    %v1818 = vsel %vm1806, %v1796, %v1799
    %v1819 = vsel %vm1809, %v1805, 1326507024
    %v1820 = vsel %vm1808, %v1802, %v1819
    %v1821 = vsel %vm1807, %v1818, %v1820
    %v1822 = vshll.u32 %v1782, 8
    %v1823 = vmul.u32.u64.compose %v1822, %v1821
    %v1824 = vextract.low.u32 %v1823
    %v1825 = vextract.high.u32 %v1823
    %v1826 = vmul.u32.u64.compose %v1822, %v1817
    %v1827 = vextract.low.u32 %v1826
    %v1828 = vextract.high.u32 %v1826
    %v1829 = vmul.u32 %v1822, %v1813
    %v1830 = vadd.s32 %v1825, %v1827
    %vm1831 = vc.u32 %v1825, %v1827
    %v1832 = vadd.s32 %v1828, 1
    %v1833 = vsel %vm1831, %v1832, %v1828
    %v1834 = vadd.s32 %v1829, %v1833
    %v1835 = vadd.s32 %v1834, 536870912
    %v1836 = vshrl.u32 %v1835, 30
    %v1837 = vshll.u32 %v1836, 30
    %v1838 = vsub.s32 %v1834, %v1837
    %vm1839 = vcmp.lt.s32.totalorder %v1838, 0
    %v1840 = vsub.s32 0, %v1838
    %v1841 = vsel %vm1839, %v1840, %v1838
    %v1842 = vclz %v1841
    %v1843 = vsub.s32 %v1842, 2
    %vm1844 = vcmp.gt.s32.totalorder 0, %v1843
    %v1845 = vsel %vm1844, 0, %v1843
    %v1846 = vsub.s32 32, %v1845
    %v1847 = vshll.u32 %v1838, %v1845
    %v1848 = vshrl.u32 %v1830, %v1846
    %v1849 = vor.u32 %v1847, %v1848
    %v1850 = vsub.s32 4294967266, %v1845
    %v1851 = vadd.s32 %v1850, 127
    %v1852 = vshll.u32 %v1851, 23
    %v1853 = vor.u32 4788187, %v1852
    %v1854 = vand.u32 2147483647, %v1853
    %v1856 = vcvt.s32.f32 %v1849
    %v1857 = vmul.f32 %v1856, %v1854
    %v1858 = vxor.u32 %v1857, 2147483648
    %v1859 = vsel %vm1776, %v1858, %v1857
    %v1860 = vsub.s32 4, %v1836
    %v1861 = vsel %vm1776, %v1860, %v1836
    %v1862 = vsel %vm1775, %v1670, %v1859
    %v1863 = vsel %vm1775, 0, %v1861
    %v1864 = vcosq.f32.pop %v1862
    %v1865 = vsinq.f32.pop %v1862
    %vm1866 = vweird.f32 %v1670
    %v1867 = vadd.s32 %v1863, 3
    %v1868 = vand.u32 %v1867, 3
    %vm1869 = vcmp.lt.s32.totalorder %v1868, 2
    %vm1870 = vcmp.eq.s32.totalorder %v1868, 0
    %v1871 = vxor.u32 %v1865, 2147483648
    %v1872 = vsel %vm1870, %v1864, %v1871
    %vm1873 = vcmp.eq.s32.totalorder %v1868, 2
    %v1874 = vxor.u32 %v1864, 2147483648
    %v1875 = vsel %vm1873, %v1874, %v1865
    %v1876 = vsel %vm1869, %v1872, %v1875
    %v1877 = vsel %vm1866, nan, %v1876
    %1879 = vrot.lane.b32.xlu0 %v1877, 32
    %v1880 = vpop.permute.xlu0 %1879
    %v1882 = vsel %vm253, %v1773, %v1880
    %s1883 = scalar_lea.vmem %s7, 16
    %1884 = vst.msk [vmem:[%s1883] sm:$0xf] %vm435, %v1882
    // Predicated region
    $region34: #{srel_vary_eta_forward.1} parent=1 // pred_check
      _
    $region35: #{srel_vary_eta_forward.1} parent=1 // pred_check_branch
      %1886 = sbr.rel (0) target = $region37
    $region36: #{srel_vary_eta_forward.1} parent=1 // pred_region
      _
    $region37: #{srel_vary_eta_forward.1} parent=1 // pred_fallthru
      _
    // Predicated region
    $region38: #{srel_vary_eta_forward.1} parent=1 // pred_check
      _
    $region39: #{srel_vary_eta_forward.1} parent=1 // pred_check_branch
      %1888 = sbr.rel (0) target = $region41
    $region40: #{srel_vary_eta_forward.1} parent=1 // pred_region
      _
    $region41: #{srel_vary_eta_forward.1} parent=1 // pred_fallthru
      _
    // Predicated region
    $region42: #{srel_vary_eta_forward.1} parent=1 // pred_check
      _
    $region43: #{srel_vary_eta_forward.1} parent=1 // pred_check_branch
      %1890 = sbr.rel (0) target = $region45
    $region44: #{srel_vary_eta_forward.1} parent=1 // pred_region
      _
    $region45: #{srel_vary_eta_forward.1} parent=1 // pred_fallthru
      _
    // Predicated region
    $region46: #{srel_vary_eta_forward.1} parent=1 // pred_check
      _
    $region47: #{srel_vary_eta_forward.1} parent=1 // pred_check_branch
      %1892 = sbr.rel (0) target = $region49
    $region48: #{srel_vary_eta_forward.1} parent=1 // pred_region
      _
    $region49: #{srel_vary_eta_forward.1} parent=1 // pred_fallthru
      _
    %1893 = vsyncpa [#allocation3], 1

</llo_original>
